<compile_context>
chip_gen: v7x
topology: tpu7x:2x2x1
jax: 0.10.0
libtpu: 0.0.40
codegen_flags: <defaults>
</compile_context>

<pallas_src>
import functools
import math

import jax
import jax.numpy as jnp
from jax.experimental import pallas as pl
from jax.experimental.pallas import tpu as pltpu


def _mha_kernel(q_ref, k_ref, v_ref, mask_ref,
                wq_ref, wk_ref, wv_ref, wo_ref, b_ref,
                o_ref, kh_scr, vh_scr, *, num_heads, d_k, scale):
    f32 = jnp.float32
    bf16 = jnp.bfloat16
    h = num_heads

    # ---- K/V projection + head split: once per batch element (query-tile 0) ----------
    @pl.when(pl.program_id(1) == 0)
    def _():
        k_in = k_ref[0].astype(bf16)                                     # (Skv, D)
        v_in = v_ref[0].astype(bf16)
        kp = jnp.dot(k_in, wk_ref[...], preferred_element_type=f32) + b_ref[1:2]
        vp = jnp.dot(v_in, wv_ref[...], preferred_element_type=f32) + b_ref[2:3]
        for i in range(h):                    # static unroll: split heads into scratch
            kh_scr[i] = kp[:, i * d_k:(i + 1) * d_k].astype(bf16)
            vh_scr[i] = vp[:, i * d_k:(i + 1) * d_k].astype(bf16)

    # ---- Q projection for this query tile --------------------------------------------
    q_in = q_ref[0].astype(bf16)                                         # (TQ, D)
    qp = jnp.dot(q_in, wq_ref[...], preferred_element_type=f32) + b_ref[0:1]
    qp = qp * scale                     # pre-scale q: S*D muls instead of h*TQ*Skv
    qh = jnp.stack([qp[:, i * d_k:(i + 1) * d_k] for i in range(h)],
                   axis=0).astype(bf16)                                  # (h, TQ, d_k)

    # ---- batched (all heads at once) attention ----------------------------------------
    scores = jnp.einsum('hqd,hkd->hqk', qh, kh_scr[...],
                        preferred_element_type=f32)                      # (h, TQ, Skv) f32
    is_masked = (mask_ref[0, 0] == 0)                                    # (1, Skv), hoisted
    scores = jnp.where(is_masked[None, :, :], -1.0e9, scores)            # masked_fill

    m = jnp.max(scores, axis=-1, keepdims=True)
    p = jnp.exp(scores - m)
    denom = jnp.sum(p, axis=-1, keepdims=True)
    p = p * pl.reciprocal(denom, approx=True)                            # EUP reciprocal
    # TODO(synk): attention dropout treated as identity (inference mode).

    attn = jnp.einsum('hqk,hkd->hqd', p.astype(bf16), vh_scr[...],
                      preferred_element_type=f32)                        # (h, TQ, d_k)
    attn2d = jnp.concatenate([attn[i] for i in range(h)], axis=-1)       # (TQ, D) merge heads

    out = jnp.dot(attn2d.astype(bf16), wo_ref[...],
                  preferred_element_type=f32) + b_ref[3:4]
    o_ref[0] = out.astype(o_ref.dtype)


def _pick_q_tile(s, target=512):
    """Largest query tile <= target that divides s (multiple of 8 when tiling)."""
    if s <= target:
        return s
    for t in range(target, 7, -1):
        if s % t == 0 and t % 8 == 0:
            return t
    return s


def multi_head_attention_forward(q, k, v, mask, params):
    """Pallas forward for MultiHeadAttentionBlock (eval mode).

    q: (B, Sq, D) f32, k/v: (B, Skv, D) f32, mask: (B, 1, 1, Skv) int32.
    """
    B, Sq, D = q.shape
    Skv = k.shape[1]
    h = params["h"]
    assert D % h == 0, "d_model must be divisible by h"
    d_k = D // h
    TQ = _pick_q_tile(Sq)
    n_q_tiles = Sq // TQ

    # bf16 weights: half the DMA bytes and bf16-native MXU feeds.
    wq = params["wq"].astype(jnp.bfloat16)
    wk = params["wk"].astype(jnp.bfloat16)
    wv = params["wv"].astype(jnp.bfloat16)
    wo = params["wo"].astype(jnp.bfloat16)
    # Biases packed into a single (4, D) f32 input (one DMA stream instead of four).
    b_all = jnp.concatenate(
        [params["bq"], params["bk"], params["bv"], params["bo"]], axis=0)

    kernel = functools.partial(_mha_kernel, num_heads=h, d_k=d_k,
                               scale=1.0 / math.sqrt(d_k))

    def wspec():
        return pl.BlockSpec((D, D), lambda b, t: (0, 0))

    in_specs = [
        pl.BlockSpec((1, TQ, D), lambda b, t: (b, t, 0)),         # q (tiled over sequence)
        pl.BlockSpec((1, Skv, D), lambda b, t: (b, 0, 0)),        # k (full length per batch)
        pl.BlockSpec((1, Skv, D), lambda b, t: (b, 0, 0)),        # v
        pl.BlockSpec((1, 1, 1, Skv), lambda b, t: (b, 0, 0, 0)),  # mask
        wspec(), wspec(), wspec(), wspec(),                       # wq, wk, wv, wo (bf16)
        pl.BlockSpec((4, D), lambda b, t: (0, 0)),                # packed biases
    ]
    out_specs = pl.BlockSpec((1, TQ, D), lambda b, t: (b, t, 0))

    return pl.pallas_call(
        kernel,
        out_shape=jax.ShapeDtypeStruct((B, Sq, D), q.dtype),
        grid=(B, n_q_tiles),
        in_specs=in_specs,
        out_specs=out_specs,
        scratch_shapes=[pltpu.VMEM((h, Skv, d_k), jnp.bfloat16),   # projected K heads
                        pltpu.VMEM((h, Skv, d_k), jnp.bfloat16)],  # projected V heads
        compiler_params=pltpu.CompilerParams(
            dimension_semantics=("parallel", "arbitrary"),
            vmem_limit_bytes=64 * 1024 * 1024),
    )(q, k, v, mask, wq, wk, wv, wo, b_all)


def reference_forward(q, k, v, mask, params):
    """Pure-JAX (f32, HIGHEST precision) reference mirroring the PyTorch module (eval)."""
    h = params["h"]
    B, Sq, D = q.shape
    Skv = k.shape[1]
    d_k = D // h
    dot = functools.partial(jnp.matmul, precision=jax.lax.Precision.HIGHEST)

    qp = dot(q, params["wq"]) + params["bq"]
    kp = dot(k, params["wk"]) + params["bk"]
    vp = dot(v, params["wv"]) + params["bv"]
    qp = qp.reshape(B, Sq, h, d_k).transpose(0, 2, 1, 3)
    kp = kp.reshape(B, Skv, h, d_k).transpose(0, 2, 1, 3)
    vp = vp.reshape(B, Skv, h, d_k).transpose(0, 2, 1, 3)
    sc = dot(qp, kp.transpose(0, 1, 3, 2)) / math.sqrt(d_k)
    sc = jnp.where(mask == 0, -1.0e9, sc)
    p = jax.nn.softmax(sc, axis=-1)
    o = dot(p, vp).transpose(0, 2, 1, 3).reshape(B, Sq, D)
    return dot(o, params["wo"]) + params["bo"]


def make_params(key, d_model, h):
    """Deterministic parameter init (PyTorch Linear-style uniform bounds)."""
    ks = jax.random.split(key, 8)

    def linear(kw, kb, fan_in, fan_out):
        bound = 1.0 / math.sqrt(fan_in)
        w = jax.random.uniform(kw, (fan_in, fan_out), jnp.float32, -bound, bound)
        b = jax.random.uniform(kb, (1, fan_out), jnp.float32, -bound, bound)
        return w, b

    wq, bq = linear(ks[0], ks[1], d_model, d_model)
    wk, bk = linear(ks[2], ks[3], d_model, d_model)
    wv, bv = linear(ks[4], ks[5], d_model, d_model)
    wo, bo = linear(ks[6], ks[7], d_model, d_model)
    return dict(h=h, wq=wq, bq=bq, wk=wk, bk=bk, wv=wv, bv=bv, wo=wo, bo=bo)


if __name__ == "__main__":
    B, S, d_model, h = 2, 8, 32, 4

    key = jax.random.PRNGKey(0)
    kq, kkv, kp = jax.random.split(key, 3)
    q_in = jax.random.normal(kq, (B, S, d_model), jnp.float32)
    kv_in = jax.random.normal(kkv, (B, S, d_model), jnp.float32)
    # mask: (B, 1, 1, S); mask out the last two key positions of batch 1
    mask = jnp.ones((B, 1, 1, S), jnp.int32)
    mask = mask.at[1, 0, 0, 6:].set(0)

    params = make_params(kp, d_model, h)

    out = multi_head_attention_forward(q_in, kv_in, kv_in, mask, params)
    out = jax.block_until_ready(out)

    ref = reference_forward(q_in, kv_in, kv_in, mask, params)
    assert out.shape == (B, S, d_model)
    assert bool(jnp.all(jnp.isfinite(out)))
    assert bool(jnp.allclose(out, ref, rtol=2e-2, atol=2e-2)), "mismatch vs reference"

    print("KERNEL_OK")
</pallas_src>

<mosaic_0001>
module attributes {stable_mosaic.version = 11 : i64} {
  func.func @_mha_kernel(%arg0: i32, %arg1: i32, %arg2: memref<1x8x32xf32, #tpu.memory_space<vmem>>, %arg3: memref<1x8x32xf32, #tpu.memory_space<vmem>>, %arg4: memref<1x8x32xf32, #tpu.memory_space<vmem>>, %arg5: memref<1x1x1x8xi32, #tpu.memory_space<vmem>>, %arg6: memref<32x32xbf16, #tpu.memory_space<vmem>>, %arg7: memref<32x32xbf16, #tpu.memory_space<vmem>>, %arg8: memref<32x32xbf16, #tpu.memory_space<vmem>>, %arg9: memref<32x32xbf16, #tpu.memory_space<vmem>>, %arg10: memref<4x32xf32, #tpu.memory_space<vmem>>, %arg11: memref<1x8x32xf32, #tpu.memory_space<vmem>>, %arg12: memref<4x8x8xbf16, #tpu.memory_space<vmem>>, %arg13: memref<4x8x8xbf16, #tpu.memory_space<vmem>>) attributes {dimension_semantics = [#tpu.dimension_semantics<parallel>, #tpu.dimension_semantics<arbitrary>], iteration_bounds = array<i64: 2, 1>, scalar_prefetch = 0 : i64, scratch_operands = 2 : i64, tpu.core_type = #tpu.core_type<tc>, window_params = [{transform_indices = @transform_0, window_bounds = array<i64: 1, 8, 32>}, {transform_indices = @transform_1, window_bounds = array<i64: 1, 8, 32>}, {transform_indices = @transform_2, window_bounds = array<i64: 1, 8, 32>}, {transform_indices = @transform_3, window_bounds = array<i64: 1, 1, 1, 8>}, {pipeline_mode = #tpu.pipeline_mode<synchronous>, transform_indices = @transform_4, window_bounds = array<i64: 32, 32>}, {pipeline_mode = #tpu.pipeline_mode<synchronous>, transform_indices = @transform_5, window_bounds = array<i64: 32, 32>}, {pipeline_mode = #tpu.pipeline_mode<synchronous>, transform_indices = @transform_6, window_bounds = array<i64: 32, 32>}, {pipeline_mode = #tpu.pipeline_mode<synchronous>, transform_indices = @transform_7, window_bounds = array<i64: 32, 32>}, {pipeline_mode = #tpu.pipeline_mode<synchronous>, transform_indices = @transform_8, window_bounds = array<i64: 4, 32>}, {transform_indices = @transform_9, window_bounds = array<i64: 1, 8, 32>}]} {
    %c0_i32 = arith.constant 0 : i32
    %0 = arith.cmpi eq, %arg1, %c0_i32 : i32
    %1 = arith.extui %0 : i1 to i32
    %c0_i32_0 = arith.constant 0 : i32
    %2 = arith.cmpi ne, %1, %c0_i32_0 : i32
    scf.if %2 {
      %c0_31 = arith.constant 0 : index
      %c0_32 = arith.constant 0 : index
      %c0_33 = arith.constant 0 : index
      %65 = vector.load %arg3[%c0_31, %c0_32, %c0_33] : memref<1x8x32xf32, #tpu.memory_space<vmem>>, vector<1x8x32xf32>
      %66 = vector.shape_cast %65 : vector<1x8x32xf32> to vector<8x32xf32>
      %67 = arith.truncf %66 : vector<8x32xf32> to vector<8x32xbf16>
      %c0_34 = arith.constant 0 : index
      %c0_35 = arith.constant 0 : index
      %c0_36 = arith.constant 0 : index
      %68 = vector.load %arg4[%c0_34, %c0_35, %c0_36] : memref<1x8x32xf32, #tpu.memory_space<vmem>>, vector<1x8x32xf32>
      %69 = vector.shape_cast %68 : vector<1x8x32xf32> to vector<8x32xf32>
      %70 = arith.truncf %69 : vector<8x32xf32> to vector<8x32xbf16>
      %c0_37 = arith.constant 0 : index
      %c0_38 = arith.constant 0 : index
      %71 = vector.load %arg7[%c0_37, %c0_38] : memref<32x32xbf16, #tpu.memory_space<vmem>>, vector<32x32xbf16>
      %cst_39 = arith.constant dense<0.000000e+00> : vector<8x32xf32>
      %72 = tpu.matmul %67, %71, %cst_39 {dimension_numbers = #tpu.dot_dimension_numbers<[1], [0], [0], [1], [0, 0, 1, 1], [], []>} : vector<8x32xbf16>, vector<32x32xbf16>, vector<8x32xf32> -> vector<8x32xf32>
      %c1 = arith.constant 1 : index
      %c0_40 = arith.constant 0 : index
      %73 = vector.load %arg10[%c1, %c0_40] : memref<4x32xf32, #tpu.memory_space<vmem>>, vector<1x32xf32>
      %74 = vector.broadcast %73 : vector<1x32xf32> to vector<8x32xf32>
      %75 = arith.addf %72, %74 : vector<8x32xf32>
      %c0_41 = arith.constant 0 : index
      %c0_42 = arith.constant 0 : index
      %76 = vector.load %arg8[%c0_41, %c0_42] : memref<32x32xbf16, #tpu.memory_space<vmem>>, vector<32x32xbf16>
      %cst_43 = arith.constant dense<0.000000e+00> : vector<8x32xf32>
      %77 = tpu.matmul %70, %76, %cst_43 {dimension_numbers = #tpu.dot_dimension_numbers<[1], [0], [0], [1], [0, 0, 1, 1], [], []>} : vector<8x32xbf16>, vector<32x32xbf16>, vector<8x32xf32> -> vector<8x32xf32>
      %c2 = arith.constant 2 : index
      %c0_44 = arith.constant 0 : index
      %78 = vector.load %arg10[%c2, %c0_44] : memref<4x32xf32, #tpu.memory_space<vmem>>, vector<1x32xf32>
      %79 = vector.broadcast %78 : vector<1x32xf32> to vector<8x32xf32>
      %80 = arith.addf %77, %79 : vector<8x32xf32>
      %81 = vector.extract_strided_slice %75 {offsets = [0, 0], sizes = [8, 8], strides = [1, 1]} : vector<8x32xf32> to vector<8x8xf32>
      %82 = arith.truncf %81 : vector<8x8xf32> to vector<8x8xbf16>
      %c0_45 = arith.constant 0 : index
      %c0_46 = arith.constant 0 : index
      %c0_47 = arith.constant 0 : index
      %83 = vector.load %arg12[%c0_45, %c0_46, %c0_47] : memref<4x8x8xbf16, #tpu.memory_space<vmem>>, vector<1x8x8xbf16>
      %84 = vector.shape_cast %83 : vector<1x8x8xbf16> to vector<8x8xbf16>
      %85 = vector.shape_cast %82 : vector<8x8xbf16> to vector<1x8x8xbf16>
      tpu.vector_store %arg12[%c0_45, %c0_46, %c0_47], %85 {strides = array<i32>} : memref<4x8x8xbf16, #tpu.memory_space<vmem>>, vector<1x8x8xbf16>,
      %86 = vector.extract_strided_slice %80 {offsets = [0, 0], sizes = [8, 8], strides = [1, 1]} : vector<8x32xf32> to vector<8x8xf32>
      %87 = arith.truncf %86 : vector<8x8xf32> to vector<8x8xbf16>
      %c0_48 = arith.constant 0 : index
      %c0_49 = arith.constant 0 : index
      %c0_50 = arith.constant 0 : index
      %88 = vector.load %arg13[%c0_48, %c0_49, %c0_50] : memref<4x8x8xbf16, #tpu.memory_space<vmem>>, vector<1x8x8xbf16>
      %89 = vector.shape_cast %88 : vector<1x8x8xbf16> to vector<8x8xbf16>
      %90 = vector.shape_cast %87 : vector<8x8xbf16> to vector<1x8x8xbf16>
      tpu.vector_store %arg13[%c0_48, %c0_49, %c0_50], %90 {strides = array<i32>} : memref<4x8x8xbf16, #tpu.memory_space<vmem>>, vector<1x8x8xbf16>,
      %91 = vector.extract_strided_slice %75 {offsets = [0, 8], sizes = [8, 8], strides = [1, 1]} : vector<8x32xf32> to vector<8x8xf32>
      %92 = arith.truncf %91 : vector<8x8xf32> to vector<8x8xbf16>
      %c1_51 = arith.constant 1 : index
      %c0_52 = arith.constant 0 : index
      %c0_53 = arith.constant 0 : index
      %93 = vector.load %arg12[%c1_51, %c0_52, %c0_53] : memref<4x8x8xbf16, #tpu.memory_space<vmem>>, vector<1x8x8xbf16>
      %94 = vector.shape_cast %93 : vector<1x8x8xbf16> to vector<8x8xbf16>
      %95 = vector.shape_cast %92 : vector<8x8xbf16> to vector<1x8x8xbf16>
      tpu.vector_store %arg12[%c1_51, %c0_52, %c0_53], %95 {strides = array<i32>} : memref<4x8x8xbf16, #tpu.memory_space<vmem>>, vector<1x8x8xbf16>,
      %96 = vector.extract_strided_slice %80 {offsets = [0, 8], sizes = [8, 8], strides = [1, 1]} : vector<8x32xf32> to vector<8x8xf32>
      %97 = arith.truncf %96 : vector<8x8xf32> to vector<8x8xbf16>
      %c1_54 = arith.constant 1 : index
      %c0_55 = arith.constant 0 : index
      %c0_56 = arith.constant 0 : index
      %98 = vector.load %arg13[%c1_54, %c0_55, %c0_56] : memref<4x8x8xbf16, #tpu.memory_space<vmem>>, vector<1x8x8xbf16>
      %99 = vector.shape_cast %98 : vector<1x8x8xbf16> to vector<8x8xbf16>
      %100 = vector.shape_cast %97 : vector<8x8xbf16> to vector<1x8x8xbf16>
      tpu.vector_store %arg13[%c1_54, %c0_55, %c0_56], %100 {strides = array<i32>} : memref<4x8x8xbf16, #tpu.memory_space<vmem>>, vector<1x8x8xbf16>,
      %101 = vector.extract_strided_slice %75 {offsets = [0, 16], sizes = [8, 8], strides = [1, 1]} : vector<8x32xf32> to vector<8x8xf32>
      %102 = arith.truncf %101 : vector<8x8xf32> to vector<8x8xbf16>
      %c2_57 = arith.constant 2 : index
      %c0_58 = arith.constant 0 : index
      %c0_59 = arith.constant 0 : index
      %103 = vector.load %arg12[%c2_57, %c0_58, %c0_59] : memref<4x8x8xbf16, #tpu.memory_space<vmem>>, vector<1x8x8xbf16>
      %104 = vector.shape_cast %103 : vector<1x8x8xbf16> to vector<8x8xbf16>
      %105 = vector.shape_cast %102 : vector<8x8xbf16> to vector<1x8x8xbf16>
      tpu.vector_store %arg12[%c2_57, %c0_58, %c0_59], %105 {strides = array<i32>} : memref<4x8x8xbf16, #tpu.memory_space<vmem>>, vector<1x8x8xbf16>,
      %106 = vector.extract_strided_slice %80 {offsets = [0, 16], sizes = [8, 8], strides = [1, 1]} : vector<8x32xf32> to vector<8x8xf32>
      %107 = arith.truncf %106 : vector<8x8xf32> to vector<8x8xbf16>
      %c2_60 = arith.constant 2 : index
      %c0_61 = arith.constant 0 : index
      %c0_62 = arith.constant 0 : index
      %108 = vector.load %arg13[%c2_60, %c0_61, %c0_62] : memref<4x8x8xbf16, #tpu.memory_space<vmem>>, vector<1x8x8xbf16>
      %109 = vector.shape_cast %108 : vector<1x8x8xbf16> to vector<8x8xbf16>
      %110 = vector.shape_cast %107 : vector<8x8xbf16> to vector<1x8x8xbf16>
      tpu.vector_store %arg13[%c2_60, %c0_61, %c0_62], %110 {strides = array<i32>} : memref<4x8x8xbf16, #tpu.memory_space<vmem>>, vector<1x8x8xbf16>,
      %111 = vector.extract_strided_slice %75 {offsets = [0, 24], sizes = [8, 8], strides = [1, 1]} : vector<8x32xf32> to vector<8x8xf32>
      %112 = arith.truncf %111 : vector<8x8xf32> to vector<8x8xbf16>
      %c3_63 = arith.constant 3 : index
      %c0_64 = arith.constant 0 : index
      %c0_65 = arith.constant 0 : index
      %113 = vector.load %arg12[%c3_63, %c0_64, %c0_65] : memref<4x8x8xbf16, #tpu.memory_space<vmem>>, vector<1x8x8xbf16>
      %114 = vector.shape_cast %113 : vector<1x8x8xbf16> to vector<8x8xbf16>
      %115 = vector.shape_cast %112 : vector<8x8xbf16> to vector<1x8x8xbf16>
      tpu.vector_store %arg12[%c3_63, %c0_64, %c0_65], %115 {strides = array<i32>} : memref<4x8x8xbf16, #tpu.memory_space<vmem>>, vector<1x8x8xbf16>,
      %116 = vector.extract_strided_slice %80 {offsets = [0, 24], sizes = [8, 8], strides = [1, 1]} : vector<8x32xf32> to vector<8x8xf32>
      %117 = arith.truncf %116 : vector<8x8xf32> to vector<8x8xbf16>
      %c3_66 = arith.constant 3 : index
      %c0_67 = arith.constant 0 : index
      %c0_68 = arith.constant 0 : index
      %118 = vector.load %arg13[%c3_66, %c0_67, %c0_68] : memref<4x8x8xbf16, #tpu.memory_space<vmem>>, vector<1x8x8xbf16>
      %119 = vector.shape_cast %118 : vector<1x8x8xbf16> to vector<8x8xbf16>
      %120 = vector.shape_cast %117 : vector<8x8xbf16> to vector<1x8x8xbf16>
      tpu.vector_store %arg13[%c3_66, %c0_67, %c0_68], %120 {strides = array<i32>} : memref<4x8x8xbf16, #tpu.memory_space<vmem>>, vector<1x8x8xbf16>,
    } else {
    }
    %c0 = arith.constant 0 : index
    %c0_1 = arith.constant 0 : index
    %c0_2 = arith.constant 0 : index
    %3 = vector.load %arg2[%c0, %c0_1, %c0_2] : memref<1x8x32xf32, #tpu.memory_space<vmem>>, vector<1x8x32xf32>
    %4 = vector.shape_cast %3 : vector<1x8x32xf32> to vector<8x32xf32>
    %5 = arith.truncf %4 : vector<8x32xf32> to vector<8x32xbf16>
    %c0_3 = arith.constant 0 : index
    %c0_4 = arith.constant 0 : index
    %6 = vector.load %arg6[%c0_3, %c0_4] : memref<32x32xbf16, #tpu.memory_space<vmem>>, vector<32x32xbf16>
    %cst = arith.constant dense<0.000000e+00> : vector<8x32xf32>
    %7 = tpu.matmul %5, %6, %cst {dimension_numbers = #tpu.dot_dimension_numbers<[1], [0], [0], [1], [0, 0, 1, 1], [], []>} : vector<8x32xbf16>, vector<32x32xbf16>, vector<8x32xf32> -> vector<8x32xf32>
    %c0_5 = arith.constant 0 : index
    %c0_6 = arith.constant 0 : index
    %8 = vector.load %arg10[%c0_5, %c0_6] : memref<4x32xf32, #tpu.memory_space<vmem>>, vector<1x32xf32>
    %9 = vector.broadcast %8 : vector<1x32xf32> to vector<8x32xf32>
    %10 = arith.addf %7, %9 : vector<8x32xf32>
    %cst_7 = arith.constant 0.353553385 : f32
    %11 = vector.broadcast %cst_7 : f32 to vector<8x32xf32>
    %12 = arith.mulf %10, %11 : vector<8x32xf32>
    %13 = vector.extract_strided_slice %12 {offsets = [0, 0], sizes = [8, 8], strides = [1, 1]} : vector<8x32xf32> to vector<8x8xf32>
    %14 = vector.extract_strided_slice %12 {offsets = [0, 8], sizes = [8, 8], strides = [1, 1]} : vector<8x32xf32> to vector<8x8xf32>
    %15 = vector.extract_strided_slice %12 {offsets = [0, 16], sizes = [8, 8], strides = [1, 1]} : vector<8x32xf32> to vector<8x8xf32>
    %16 = vector.extract_strided_slice %12 {offsets = [0, 24], sizes = [8, 8], strides = [1, 1]} : vector<8x32xf32> to vector<8x8xf32>
    %17 = vector.shape_cast %13 : vector<8x8xf32> to vector<1x8x8xf32>
    %18 = vector.shape_cast %14 : vector<8x8xf32> to vector<1x8x8xf32>
    %19 = vector.shape_cast %15 : vector<8x8xf32> to vector<1x8x8xf32>
    %20 = vector.shape_cast %16 : vector<8x8xf32> to vector<1x8x8xf32>
    %21 = tpu.concatenate %17, %18, %19, %20 in 0 : vector<1x8x8xf32>, vector<1x8x8xf32>, vector<1x8x8xf32>, vector<1x8x8xf32> -> vector<4x8x8xf32>
    %22 = arith.truncf %21 : vector<4x8x8xf32> to vector<4x8x8xbf16>
    %c0_8 = arith.constant 0 : index
    %c0_9 = arith.constant 0 : index
    %c0_10 = arith.constant 0 : index
    %23 = vector.load %arg12[%c0_8, %c0_9, %c0_10] : memref<4x8x8xbf16, #tpu.memory_space<vmem>>, vector<4x8x8xbf16>
    "tpu.trace_start"() <{level = 10 : i32, message = "hqd,hkd->hqk"}> : () -> ()
    %cst_11 = arith.constant dense<0.000000e+00> : vector<4x8x8xf32>
    %24 = tpu.matmul %22, %23, %cst_11 {dimension_numbers = #tpu.dot_dimension_numbers<[2], [2], [1], [1], [0, 0, 0, 1, 1, 1], [0], [0]>} : vector<4x8x8xbf16>, vector<4x8x8xbf16>, vector<4x8x8xf32> -> vector<4x8x8xf32>
    "tpu.trace_stop"() : () -> ()
    %c0_12 = arith.constant 0 : index
    %c0_13 = arith.constant 0 : index
    %c0_14 = arith.constant 0 : index
    %c0_15 = arith.constant 0 : index
    %25 = vector.load %arg5[%c0_12, %c0_13, %c0_14, %c0_15] : memref<1x1x1x8xi32, #tpu.memory_space<vmem>>, vector<1x1x1x8xi32>
    %26 = vector.shape_cast %25 : vector<1x1x1x8xi32> to vector<1x8xi32>
    %c0_i32_16 = arith.constant 0 : i32
    %27 = vector.broadcast %c0_i32_16 : i32 to vector<1x8xi32>
    %28 = arith.cmpi eq, %26, %27 : vector<1x8xi32>
    %29 = vector.shape_cast %28 : vector<1x8xi1> to vector<1x1x8xi1>
    %cst_17 = arith.constant -1.000000e+09 : f32
    %30 = vector.shape_cast %29 : vector<1x1x8xi1> to vector<1x1x8xi1>
    %31 = vector.broadcast %30 : vector<1x1x8xi1> to vector<4x8x8xi1>
    %32 = vector.broadcast %cst_17 : f32 to vector<4x8x8xf32>
    %33 = arith.select %31, %32, %24 : vector<4x8x8xi1>, vector<4x8x8xf32>
    %cst_18 = arith.constant dense<0xFF800000> : vector<4x8xf32>
    %34 = vector.multi_reduction <maximumf>, %33, %cst_18 [2] : vector<4x8x8xf32> to vector<4x8xf32>
    %35 = vector.shape_cast %34 : vector<4x8xf32> to vector<4x8x1xf32>
    %36 = vector.broadcast %35 : vector<4x8x1xf32> to vector<4x8x8xf32>
    %37 = arith.subf %33, %36 : vector<4x8x8xf32>
    %38 = math.exp %37 : vector<4x8x8xf32>
    %cst_19 = arith.constant dense<0.000000e+00> : vector<4x8xf32>
    %39 = vector.multi_reduction <add>, %38, %cst_19 [2] : vector<4x8x8xf32> to vector<4x8xf32>
    %40 = vector.shape_cast %39 : vector<4x8xf32> to vector<4x8x1xf32>
    %41 = tpu.reciprocal %40 {approx = true} : vector<4x8x1xf32> -> vector<4x8x1xf32>
    %42 = vector.broadcast %41 : vector<4x8x1xf32> to vector<4x8x8xf32>
    %43 = arith.mulf %38, %42 : vector<4x8x8xf32>
    %44 = arith.truncf %43 : vector<4x8x8xf32> to vector<4x8x8xbf16>
    %c0_20 = arith.constant 0 : index
    %c0_21 = arith.constant 0 : index
    %c0_22 = arith.constant 0 : index
    %45 = vector.load %arg13[%c0_20, %c0_21, %c0_22] : memref<4x8x8xbf16, #tpu.memory_space<vmem>>, vector<4x8x8xbf16>
    "tpu.trace_start"() <{level = 10 : i32, message = "hqk,hkd->hqd"}> : () -> ()
    %cst_23 = arith.constant dense<0.000000e+00> : vector<4x8x8xf32>
    %46 = tpu.matmul %44, %45, %cst_23 {dimension_numbers = #tpu.dot_dimension_numbers<[2], [1], [1], [2], [0, 0, 0, 1, 1, 2], [0], [0]>} : vector<4x8x8xbf16>, vector<4x8x8xbf16>, vector<4x8x8xf32> -> vector<4x8x8xf32>
    "tpu.trace_stop"() : () -> ()
    %47 = vector.extract_strided_slice %46 {offsets = [0, 0, 0], sizes = [1, 8, 8], strides = [1, 1, 1]} : vector<4x8x8xf32> to vector<1x8x8xf32>
    %48 = vector.shape_cast %47 : vector<1x8x8xf32> to vector<8x8xf32>
    %49 = vector.extract_strided_slice %46 {offsets = [1, 0, 0], sizes = [1, 8, 8], strides = [1, 1, 1]} : vector<4x8x8xf32> to vector<1x8x8xf32>
    %50 = vector.shape_cast %49 : vector<1x8x8xf32> to vector<8x8xf32>
    %51 = vector.extract_strided_slice %46 {offsets = [2, 0, 0], sizes = [1, 8, 8], strides = [1, 1, 1]} : vector<4x8x8xf32> to vector<1x8x8xf32>
    %52 = vector.shape_cast %51 : vector<1x8x8xf32> to vector<8x8xf32>
    %53 = vector.extract_strided_slice %46 {offsets = [3, 0, 0], sizes = [1, 8, 8], strides = [1, 1, 1]} : vector<4x8x8xf32> to vector<1x8x8xf32>
    %54 = vector.shape_cast %53 : vector<1x8x8xf32> to vector<8x8xf32>
    %55 = tpu.concatenate %48, %50, %52, %54 in 1 : vector<8x8xf32>, vector<8x8xf32>, vector<8x8xf32>, vector<8x8xf32> -> vector<8x32xf32>
    %56 = arith.truncf %55 : vector<8x32xf32> to vector<8x32xbf16>
    %c0_24 = arith.constant 0 : index
    %c0_25 = arith.constant 0 : index
    %57 = vector.load %arg9[%c0_24, %c0_25] : memref<32x32xbf16, #tpu.memory_space<vmem>>, vector<32x32xbf16>
    %cst_26 = arith.constant dense<0.000000e+00> : vector<8x32xf32>
    %58 = tpu.matmul %56, %57, %cst_26 {dimension_numbers = #tpu.dot_dimension_numbers<[1], [0], [0], [1], [0, 0, 1, 1], [], []>} : vector<8x32xbf16>, vector<32x32xbf16>, vector<8x32xf32> -> vector<8x32xf32>
    %c3 = arith.constant 3 : index
    %c0_27 = arith.constant 0 : index
    %59 = vector.load %arg10[%c3, %c0_27] : memref<4x32xf32, #tpu.memory_space<vmem>>, vector<1x32xf32>
    %60 = vector.broadcast %59 : vector<1x32xf32> to vector<8x32xf32>
    %61 = arith.addf %58, %60 : vector<8x32xf32>
    %c0_28 = arith.constant 0 : index
    %c0_29 = arith.constant 0 : index
    %c0_30 = arith.constant 0 : index
    %62 = vector.load %arg11[%c0_28, %c0_29, %c0_30] : memref<1x8x32xf32, #tpu.memory_space<vmem>>, vector<1x8x32xf32>
    %63 = vector.shape_cast %62 : vector<1x8x32xf32> to vector<8x32xf32>
    %64 = vector.shape_cast %61 : vector<8x32xf32> to vector<1x8x32xf32>
    tpu.vector_store %arg11[%c0_28, %c0_29, %c0_30], %64 {strides = array<i32>} : memref<1x8x32xf32, #tpu.memory_space<vmem>>, vector<1x8x32xf32>,
    return
  }
  func.func @transform_0(%arg0: i32, %arg1: i32) -> (i32, i32, i32) {
    %c0_i32 = arith.constant 0 : i32
    %c0_i32_0 = arith.constant 0 : i32
    return %arg0, %arg1, %c0_i32 : i32, i32, i32
  }
  func.func @transform_1(%arg0: i32, %arg1: i32) -> (i32, i32, i32) {
    %c0_i32 = arith.constant 0 : i32
    %c0_i32_0 = arith.constant 0 : i32
    %c0_i32_1 = arith.constant 0 : i32
    return %arg0, %c0_i32, %c0_i32_0 : i32, i32, i32
  }
  func.func @transform_2(%arg0: i32, %arg1: i32) -> (i32, i32, i32) {
    %c0_i32 = arith.constant 0 : i32
    %c0_i32_0 = arith.constant 0 : i32
    %c0_i32_1 = arith.constant 0 : i32
    return %arg0, %c0_i32, %c0_i32_0 : i32, i32, i32
  }
  func.func @transform_3(%arg0: i32, %arg1: i32) -> (i32, i32, i32, i32) {
    %c0_i32 = arith.constant 0 : i32
    %c0_i32_0 = arith.constant 0 : i32
    %c0_i32_1 = arith.constant 0 : i32
    %c0_i32_2 = arith.constant 0 : i32
    return %arg0, %c0_i32, %c0_i32_0, %c0_i32_1 : i32, i32, i32, i32
  }
  func.func @transform_4(%arg0: i32, %arg1: i32) -> (i32, i32) {
    %c0_i32 = arith.constant 0 : i32
    %c0_i32_0 = arith.constant 0 : i32
    %c0_i32_1 = arith.constant 0 : i32
    return %c0_i32, %c0_i32_0 : i32, i32
  }
  func.func @transform_5(%arg0: i32, %arg1: i32) -> (i32, i32) {
    %c0_i32 = arith.constant 0 : i32
    %c0_i32_0 = arith.constant 0 : i32
    %c0_i32_1 = arith.constant 0 : i32
    return %c0_i32, %c0_i32_0 : i32, i32
  }
  func.func @transform_6(%arg0: i32, %arg1: i32) -> (i32, i32) {
    %c0_i32 = arith.constant 0 : i32
    %c0_i32_0 = arith.constant 0 : i32
    %c0_i32_1 = arith.constant 0 : i32
    return %c0_i32, %c0_i32_0 : i32, i32
  }
  func.func @transform_7(%arg0: i32, %arg1: i32) -> (i32, i32) {
    %c0_i32 = arith.constant 0 : i32
    %c0_i32_0 = arith.constant 0 : i32
    %c0_i32_1 = arith.constant 0 : i32
    return %c0_i32, %c0_i32_0 : i32, i32
  }
  func.func @transform_8(%arg0: i32, %arg1: i32) -> (i32, i32) {
    %c0_i32 = arith.constant 0 : i32
    %c0_i32_0 = arith.constant 0 : i32
    %c0_i32_1 = arith.constant 0 : i32
    return %c0_i32, %c0_i32_0 : i32, i32
  }
  func.func @transform_9(%arg0: i32, %arg1: i32) -> (i32, i32, i32) {
    %c0_i32 = arith.constant 0 : i32
    %c0_i32_0 = arith.constant 0 : i32
    return %arg0, %arg1, %c0_i32 : i32, i32, i32
  }
}

</mosaic_0001>

<llo_original>
// kernel: tpu_custom_call.1
$region0: #{tpu_custom_call.1}
  #allocation0 [shape = 'u32[]', space=smem, size = 0x4, offset = 0x4, fixed_abs, tag = 'smem constant byte address 0x4 - core index']
  #allocation1 [shape = 'u32[144,128]{1,0:T(1,128)}', space=vmem, size = 0x12000, scoped, tag = 'internal scratch']
  #allocation2 [shape = 'bf16[4,8,8]{2,1,0:T(8,128)(2,1)}', space=vmem, size = 0x2000, scoped, tag = 'scratch operand']
  #allocation3 [shape = 'bf16[4,8,8]{2,1,0:T(8,128)(2,1)}', space=vmem, size = 0x2000, scoped, tag = 'scratch operand']
  %s0 = inlined_call_operand.hbm [shape: f32[2,8,32], index: 0, kind: input, shape index: {}]
  %s1 = inlined_call_operand.hbm [shape: f32[2,8,32], index: 1, kind: input, shape index: {}]
  %s2 = inlined_call_operand.hbm [shape: f32[2,8,32], index: 2, kind: input, shape index: {}]
  %s3 = inlined_call_operand.hbm [shape: s32[2,1,1,8], index: 3, kind: input, shape index: {}]
  %s4 = inlined_call_operand.hbm [shape: bf16[32,32], index: 4, kind: input, shape index: {}]
  %s5 = inlined_call_operand.hbm [shape: bf16[32,32], index: 5, kind: input, shape index: {}]
  %s6 = inlined_call_operand.hbm [shape: bf16[32,32], index: 6, kind: input, shape index: {}]
  %s7 = inlined_call_operand.hbm [shape: bf16[32,32], index: 7, kind: input, shape index: {}]
  %s8 = inlined_call_operand.hbm [shape: f32[4,32], index: 8, kind: input, shape index: {}]
  %s9 = inlined_call_operand.hbm [shape: f32[2,8,32], index: 9, kind: output, shape index: {}]
  %s10 = sld [smem:[#allocation0]]
  $region109: #{tpu_custom_call.1} parent=0
    _
  %s12 = ssub.s32 1, %s10
  %s13 = scalar_select 0, %s12, %s10
  $region1: #{tpu_custom_call.1} parent=0
    #allocation4 [shape = 'u8[8192]{0}', space=vmem, size = 0x2000, scoped, tag = 'input window, operand 0']
    #allocation5 [shape = 's32[2]{0}', space=sflag, size = 0x8, scoped, tag = 'scoped memory for tpu_custom_call.1']
    #allocation6 [shape = 's32[2]{0}', space=sflag, size = 0x8, scoped, tag = 'scoped memory for tpu_custom_call.1']
    #allocation7 [shape = 'u8[8192]{0}', space=vmem, size = 0x2000, scoped, tag = 'input window, operand 1']
    #allocation8 [shape = 's32[2]{0}', space=sflag, size = 0x8, scoped, tag = 'scoped memory for tpu_custom_call.1']
    #allocation9 [shape = 'u8[8192]{0}', space=vmem, size = 0x2000, scoped, tag = 'input window, operand 2']
    #allocation10 [shape = 'u8[1024]{0}', space=vmem, size = 0x400, scoped, tag = 'input window, operand 3']
    #allocation11 [shape = 's32[2]{0}', space=sflag, size = 0x8, scoped, tag = 'scoped memory for tpu_custom_call.1']
    #allocation12 [shape = 'u8[8192]{0}', space=vmem, size = 0x2000, scoped, tag = 'input window, operand 4, single buffered']
    #allocation13 [shape = 'u8[8192]{0}', space=vmem, size = 0x2000, scoped, tag = 'input window, operand 5, single buffered']
    #allocation14 [shape = 's32[1]{0}', space=sflag, size = 0x4, scoped, tag = 'scoped memory for tpu_custom_call.1']
    #allocation15 [shape = 'u8[8192]{0}', space=vmem, size = 0x2000, scoped, tag = 'input window, operand 6, single buffered']
    #allocation16 [shape = 'u8[8192]{0}', space=vmem, size = 0x2000, scoped, tag = 'input window, operand 7, single buffered']
    #allocation17 [shape = 's32[1]{0}', space=sflag, size = 0x4, scoped, tag = 'scoped memory for tpu_custom_call.1']
    #allocation18 [shape = 'u8[2048]{0}', space=vmem, size = 0x800, scoped, tag = 'input window, operand 8, single buffered']
    #allocation19 [shape = 'u8[8192]{0}', space=vmem, size = 0x2000, scoped, tag = 'output window, operand 0']
    %14 = vsyncpa [#allocation5], 0
    %s15 = scalar_lea.sflag [#allocation5], 1
    %16 = vsyncpa %s15, 0
    %17 = vsyncpa [#allocation8], 0
    %s18 = scalar_lea.sflag [#allocation8], 1
    %19 = vsyncpa %s18, 0
    %20 = vsyncpa [#allocation11], 0
    %s21 = scalar_lea.sflag [#allocation11], 1
    %22 = vsyncpa %s21, 0
    %23 = vsyncpa [#allocation14], 0
    %24 = vsyncpa [#allocation17], 0
    %25 = vsyncpa [#allocation6], 0
    %s26 = scalar_lea.sflag [#allocation6], 1
    %27 = vsyncpa %s26, 0
    loop: start=0, step=1, limit=4
    $region2: #{tpu_custom_call.1} parent=1 // loop_pre_header
      _
    $region3: #{tpu_custom_call.1} parent=1 // loop_header
      %s29 = sphi 0, %s33
      %p30 = scmp.ge.s32.totalorder %s29, 4
      %s36 = sphi 0, %s48
      %s37 = sphi 0, %s44
      %s38 = sphi 0, %s36
      %s39 = sphi 0, %s37
      %s40 = sphi 0, %s38
      %s41 = sphi 0, %s39
      %s53 = sphi 0, %s55
      %s56 = sphi 0, %s53
      %s57 = sphi 0, %s56
      %s73 = sphi 0, %s57
      %s79 = sphi 0, %s81
      %s82 = sphi 0, %s79
      %s83 = sphi 0, %s82
      %s99 = sphi 0, %s83
      %s105 = sphi 0, %s107
      %s108 = sphi 0, %s105
      %s109 = sphi 0, %s108
      %s125 = sphi 0, %s109
      %s131 = sphi 0, %s133
      %s134 = sphi 0, %s131
      %s135 = sphi 0, %s134
      %s151 = sphi 0, %s135
      %s155 = sphi 0, %s155
      %s157 = sphi 0, %s155
      %s158 = sphi 0, %s157
      %s172 = sphi 0, %s158
      %s176 = sphi 0, %s176
      %s178 = sphi 0, %s176
      %s179 = sphi 0, %s178
      %s193 = sphi 0, %s179
      %s197 = sphi 0, %s197
      %s199 = sphi 0, %s197
      %s200 = sphi 0, %s199
      %s214 = sphi 0, %s200
      %s218 = sphi 0, %s218
      %s220 = sphi 0, %s218
      %s221 = sphi 0, %s220
      %s235 = sphi 0, %s221
      %s239 = sphi 0, %s239
      %s241 = sphi 0, %s239
      %s242 = sphi 0, %s241
      %s256 = sphi 0, %s242
      %s264 = sphi 0, %s266
      %s267 = sphi 0, %s264
      %s268 = sphi 0, %s267
      %s284 = sphi 0, %s268
    $region4: #{tpu_custom_call.1} parent=1 // loop_header_branch
      %32 = sbr.rel (%p30) target = $region8
    $region5: #{tpu_custom_call.1} parent=1 // loop_body
      %s34 = ssub.s32 %s29, 1
      %s35 = ssub.s32 %s29, 2
      %s42 = sadd.s32 1, %s37
      %p43 = scmp.ge.s32.totalorder %s42, 1
      %s44 = scalar_select %p43, 0, %s42
      %s45 = sadd.s32 1, %s36
      %s46 = scalar_select %p43, %s45, %s36
      %p47 = scmp.ge.s32.totalorder %s46, 2
      %s48 = scalar_select %p47, 0, %s46
      %s49 = ssub.s32 %s36, %s48
      %s50 = ssub.s32 %s37, %s44
      %s51 = sor.u32 %s49, %s50
      %p52 = scmp.eq.s32.totalorder %s51, 0
      %s54 = sadd.s32 %s53, 1
      %s55 = scalar_select %p52, %s53, %s54
      %p58 = pneg %p52
      %p59 = scmp.eq.s32.totalorder %s29, 1
      %p60 = por %p58, %p59
      %p61 = scmp.ne.s32.totalorder %s53, %s56
      %p62 = scmp.eq.s32.totalorder %s29, 0
      %p63 = por %p61, %p62
      %p64 = scmp.ne.s32.totalorder %s53, %s56
      %p65 = scmp.eq.s32.totalorder %s34, 1
      %p66 = por %p64, %p65
      %p67 = scmp.ne.s32.totalorder %s56, %s57
      %p68 = scmp.eq.s32.totalorder %s34, 0
      %p69 = por %p67, %p68
      %p70 = scmp.ne.s32.totalorder %s56, %s57
      %p71 = scmp.eq.s32.totalorder %s35, 1
      %p72 = por %p70, %p71
      %p74 = scmp.ne.s32.totalorder %s57, %s73
      %p75 = scmp.eq.s32.totalorder %s35, 0
      %p76 = por %p74, %p75
      %s77 = ssub.s32 %s36, %s48
      %p78 = scmp.eq.s32.totalorder %s77, 0
      %s80 = sadd.s32 %s79, 1
      %s81 = scalar_select %p78, %s79, %s80
      %p84 = pneg %p78
      %p85 = scmp.eq.s32.totalorder %s29, 1
      %p86 = por %p84, %p85
      %p87 = scmp.ne.s32.totalorder %s79, %s82
      %p88 = scmp.eq.s32.totalorder %s29, 0
      %p89 = por %p87, %p88
      %p90 = scmp.ne.s32.totalorder %s79, %s82
      %p91 = scmp.eq.s32.totalorder %s34, 1
      %p92 = por %p90, %p91
      %p93 = scmp.ne.s32.totalorder %s82, %s83
      %p94 = scmp.eq.s32.totalorder %s34, 0
      %p95 = por %p93, %p94
      %p96 = scmp.ne.s32.totalorder %s82, %s83
      %p97 = scmp.eq.s32.totalorder %s35, 1
      %p98 = por %p96, %p97
      %p100 = scmp.ne.s32.totalorder %s83, %s99
      %p101 = scmp.eq.s32.totalorder %s35, 0
      %p102 = por %p100, %p101
      %s103 = ssub.s32 %s36, %s48
      %p104 = scmp.eq.s32.totalorder %s103, 0
      %s106 = sadd.s32 %s105, 1
      %s107 = scalar_select %p104, %s105, %s106
      %p110 = pneg %p104
      %p111 = scmp.eq.s32.totalorder %s29, 1
      %p112 = por %p110, %p111
      %p113 = scmp.ne.s32.totalorder %s105, %s108
      %p114 = scmp.eq.s32.totalorder %s29, 0
      %p115 = por %p113, %p114
      %p116 = scmp.ne.s32.totalorder %s105, %s108
      %p117 = scmp.eq.s32.totalorder %s34, 1
      %p118 = por %p116, %p117
      %p119 = scmp.ne.s32.totalorder %s108, %s109
      %p120 = scmp.eq.s32.totalorder %s34, 0
      %p121 = por %p119, %p120
      %p122 = scmp.ne.s32.totalorder %s108, %s109
      %p123 = scmp.eq.s32.totalorder %s35, 1
      %p124 = por %p122, %p123
      %p126 = scmp.ne.s32.totalorder %s109, %s125
      %p127 = scmp.eq.s32.totalorder %s35, 0
      %p128 = por %p126, %p127
      %s129 = ssub.s32 %s36, %s48
      %p130 = scmp.eq.s32.totalorder %s129, 0
      %s132 = sadd.s32 %s131, 1
      %s133 = scalar_select %p130, %s131, %s132
      %p136 = pneg %p130
      %p137 = scmp.eq.s32.totalorder %s29, 1
      %p138 = por %p136, %p137
      %p139 = scmp.ne.s32.totalorder %s131, %s134
      %p140 = scmp.eq.s32.totalorder %s29, 0
      %p141 = por %p139, %p140
      %p142 = scmp.ne.s32.totalorder %s131, %s134
      %p143 = scmp.eq.s32.totalorder %s34, 1
      %p144 = por %p142, %p143
      %p145 = scmp.ne.s32.totalorder %s134, %s135
      %p146 = scmp.eq.s32.totalorder %s34, 0
      %p147 = por %p145, %p146
      %p148 = scmp.ne.s32.totalorder %s134, %s135
      %p149 = scmp.eq.s32.totalorder %s35, 1
      %p150 = por %p148, %p149
      %p152 = scmp.ne.s32.totalorder %s135, %s151
      %p153 = scmp.eq.s32.totalorder %s35, 0
      %p154 = por %p152, %p153
      %s156 = sadd.s32 %s155, 1
      %p159 = scmp.eq.s32.totalorder %s29, 1
      %p160 = scmp.ne.s32.totalorder %s155, %s157
      %p161 = scmp.eq.s32.totalorder %s29, 0
      %p162 = por %p160, %p161
      %p163 = scmp.ne.s32.totalorder %s155, %s157
      %p164 = scmp.eq.s32.totalorder %s34, 1
      %p165 = por %p163, %p164
      %p166 = scmp.ne.s32.totalorder %s157, %s158
      %p167 = scmp.eq.s32.totalorder %s34, 0
      %p168 = por %p166, %p167
      %p169 = scmp.ne.s32.totalorder %s157, %s158
      %p170 = scmp.eq.s32.totalorder %s35, 1
      %p171 = por %p169, %p170
      %p173 = scmp.ne.s32.totalorder %s158, %s172
      %p174 = scmp.eq.s32.totalorder %s35, 0
      %p175 = por %p173, %p174
      %s177 = sadd.s32 %s176, 1
      %p180 = scmp.eq.s32.totalorder %s29, 1
      %p181 = scmp.ne.s32.totalorder %s176, %s178
      %p182 = scmp.eq.s32.totalorder %s29, 0
      %p183 = por %p181, %p182
      %p184 = scmp.ne.s32.totalorder %s176, %s178
      %p185 = scmp.eq.s32.totalorder %s34, 1
      %p186 = por %p184, %p185
      %p187 = scmp.ne.s32.totalorder %s178, %s179
      %p188 = scmp.eq.s32.totalorder %s34, 0
      %p189 = por %p187, %p188
      %p190 = scmp.ne.s32.totalorder %s178, %s179
      %p191 = scmp.eq.s32.totalorder %s35, 1
      %p192 = por %p190, %p191
      %p194 = scmp.ne.s32.totalorder %s179, %s193
      %p195 = scmp.eq.s32.totalorder %s35, 0
      %p196 = por %p194, %p195
      %s198 = sadd.s32 %s197, 1
      %p201 = scmp.eq.s32.totalorder %s29, 1
      %p202 = scmp.ne.s32.totalorder %s197, %s199
      %p203 = scmp.eq.s32.totalorder %s29, 0
      %p204 = por %p202, %p203
      %p205 = scmp.ne.s32.totalorder %s197, %s199
      %p206 = scmp.eq.s32.totalorder %s34, 1
      %p207 = por %p205, %p206
      %p208 = scmp.ne.s32.totalorder %s199, %s200
      %p209 = scmp.eq.s32.totalorder %s34, 0
      %p210 = por %p208, %p209
      %p211 = scmp.ne.s32.totalorder %s199, %s200
      %p212 = scmp.eq.s32.totalorder %s35, 1
      %p213 = por %p211, %p212
      %p215 = scmp.ne.s32.totalorder %s200, %s214
      %p216 = scmp.eq.s32.totalorder %s35, 0
      %p217 = por %p215, %p216
      %s219 = sadd.s32 %s218, 1
      %p222 = scmp.eq.s32.totalorder %s29, 1
      %p223 = scmp.ne.s32.totalorder %s218, %s220
      %p224 = scmp.eq.s32.totalorder %s29, 0
      %p225 = por %p223, %p224
      %p226 = scmp.ne.s32.totalorder %s218, %s220
      %p227 = scmp.eq.s32.totalorder %s34, 1
      %p228 = por %p226, %p227
      %p229 = scmp.ne.s32.totalorder %s220, %s221
      %p230 = scmp.eq.s32.totalorder %s34, 0
      %p231 = por %p229, %p230
      %p232 = scmp.ne.s32.totalorder %s220, %s221
      %p233 = scmp.eq.s32.totalorder %s35, 1
      %p234 = por %p232, %p233
      %p236 = scmp.ne.s32.totalorder %s221, %s235
      %p237 = scmp.eq.s32.totalorder %s35, 0
      %p238 = por %p236, %p237
      %s240 = sadd.s32 %s239, 1
      %p243 = scmp.eq.s32.totalorder %s29, 1
      %p244 = scmp.ne.s32.totalorder %s239, %s241
      %p245 = scmp.eq.s32.totalorder %s29, 0
      %p246 = por %p244, %p245
      %p247 = scmp.ne.s32.totalorder %s239, %s241
      %p248 = scmp.eq.s32.totalorder %s34, 1
      %p249 = por %p247, %p248
      %p250 = scmp.ne.s32.totalorder %s241, %s242
      %p251 = scmp.eq.s32.totalorder %s34, 0
      %p252 = por %p250, %p251
      %p253 = scmp.ne.s32.totalorder %s241, %s242
      %p254 = scmp.eq.s32.totalorder %s35, 1
      %p255 = por %p253, %p254
      %p257 = scmp.ne.s32.totalorder %s242, %s256
      %p258 = scmp.eq.s32.totalorder %s35, 0
      %p259 = por %p257, %p258
      %s260 = ssub.s32 %s36, %s48
      %s261 = ssub.s32 %s37, %s44
      %s262 = sor.u32 %s260, %s261
      %p263 = scmp.eq.s32.totalorder %s262, 0
      %s265 = sadd.s32 %s264, 1
      %s266 = scalar_select %p263, %s264, %s265
      %p269 = pneg %p263
      %p270 = scmp.eq.s32.totalorder %s29, 1
      %p271 = por %p269, %p270
      %p272 = scmp.ne.s32.totalorder %s264, %s267
      %p273 = scmp.eq.s32.totalorder %s29, 0
      %p274 = por %p272, %p273
      %p275 = scmp.ne.s32.totalorder %s264, %s267
      %p276 = scmp.eq.s32.totalorder %s34, 1
      %p277 = por %p275, %p276
      %p278 = scmp.ne.s32.totalorder %s267, %s268
      %p279 = scmp.eq.s32.totalorder %s34, 0
      %p280 = por %p278, %p279
      %p281 = scmp.ne.s32.totalorder %s267, %s268
      %p282 = scmp.eq.s32.totalorder %s35, 1
      %p283 = por %p281, %p282
      %p285 = scmp.ne.s32.totalorder %s268, %s284
      %p286 = scmp.eq.s32.totalorder %s35, 0
      %p287 = por %p285, %p286
      %p288 = scmp.le.s32.totalorder 1, %s29
      %p289 = scmp.lt.s32.totalorder %s29, 3
      %p290 = pnand %p288, %p289
      %p291 = pneg %p290
      // Predicated region
      $region9: #{tpu_custom_call.1} parent=5 // pred_check
        _
      $region10: #{tpu_custom_call.1} parent=5 // pred_check_branch
        %293 = sbr.rel (%p290) target = $region12
      $region11: #{tpu_custom_call.1} parent=5 // pred_region
        %s294 = ssub.s32 %s29, 1
        // Predicated region
        $region13: #{tpu_custom_call.1} parent=11 // pred_check
          %p295 = pneg %p168
        $region14: #{tpu_custom_call.1} parent=11 // pred_check_branch
          %297 = sbr.rel (%p295) target = $region16
        $region15: #{tpu_custom_call.1} parent=11 // pred_region
          %s299 = ssub.s32 256, 256
          %300 = vsyncadd [#allocation11], %s299
          %s301 = sshll.u32 [#allocation12], 4
          %s302 = int_to_ptr.vmem [resolvable:$true] %s301
          %307 = dma.hbm_to_vmem [thread:$0]  %s4, 256, %s302, [#allocation11], 64, 64, 4
        $region16: #{tpu_custom_call.1} parent=11 // pred_fallthru
          _
        // Predicated region
        $region17: #{tpu_custom_call.1} parent=11 // pred_check
          %p308 = pneg %p189
        $region18: #{tpu_custom_call.1} parent=11 // pred_check_branch
          %310 = sbr.rel (%p308) target = $region20
        $region19: #{tpu_custom_call.1} parent=11 // pred_region
          %s312 = ssub.s32 256, 256
          %313 = vsyncadd [#allocation14], %s312
          %s314 = sshll.u32 [#allocation13], 4
          %s315 = int_to_ptr.vmem [resolvable:$true] %s314
          %320 = dma.hbm_to_vmem [thread:$0]  %s5, 256, %s315, [#allocation14], 64, 64, 4
        $region20: #{tpu_custom_call.1} parent=11 // pred_fallthru
          _
        // Predicated region
        $region21: #{tpu_custom_call.1} parent=11 // pred_check
          %p321 = pneg %p210
        $region22: #{tpu_custom_call.1} parent=11 // pred_check_branch
          %323 = sbr.rel (%p321) target = $region24
        $region23: #{tpu_custom_call.1} parent=11 // pred_region
          %s325 = ssub.s32 256, 256
          %326 = vsyncadd [#allocation14], %s325
          %s327 = sshll.u32 [#allocation15], 4
          %s328 = int_to_ptr.vmem [resolvable:$true] %s327
          %333 = dma.hbm_to_vmem [thread:$0]  %s6, 256, %s328, [#allocation14], 64, 64, 4
        $region24: #{tpu_custom_call.1} parent=11 // pred_fallthru
          _
        // Predicated region
        $region25: #{tpu_custom_call.1} parent=11 // pred_check
          %p334 = pneg %p231
        $region26: #{tpu_custom_call.1} parent=11 // pred_check_branch
          %336 = sbr.rel (%p334) target = $region28
        $region27: #{tpu_custom_call.1} parent=11 // pred_region
          %s338 = ssub.s32 256, 256
          %339 = vsyncadd [#allocation17], %s338
          %s340 = sshll.u32 [#allocation16], 4
          %s341 = int_to_ptr.vmem [resolvable:$true] %s340
          %346 = dma.hbm_to_vmem [thread:$0]  %s7, 256, %s341, [#allocation17], 64, 64, 4
        $region28: #{tpu_custom_call.1} parent=11 // pred_fallthru
          _
        // Predicated region
        $region29: #{tpu_custom_call.1} parent=11 // pred_check
          %p347 = pneg %p252
        $region30: #{tpu_custom_call.1} parent=11 // pred_check_branch
          %349 = sbr.rel (%p347) target = $region32
        $region31: #{tpu_custom_call.1} parent=11 // pred_region
          %s351 = ssub.s32 64, 64
          %352 = vsyncadd [#allocation17], %s351
          %s354 = sshll.u32 [#allocation18], 4
          %s355 = int_to_ptr.vmem [resolvable:$true] %s354
          %357 = dma.hbm_to_vmem [thread:$0]  %s8, 64, %s355, [#allocation17]
        $region32: #{tpu_custom_call.1} parent=11 // pred_fallthru
          _
      $region12: #{tpu_custom_call.1} parent=5 // pred_fallthru
        _
      %p358 = scmp.lt.s32.totalorder %s29, 2
      // Predicated region
      $region33: #{tpu_custom_call.1} parent=5 // pred_check
        %p359 = pneg %p358
      $region34: #{tpu_custom_call.1} parent=5 // pred_check_branch
        %361 = sbr.rel (%p359) target = $region36
      $region35: #{tpu_custom_call.1} parent=5 // pred_region
        // Predicated region
        $region37: #{tpu_custom_call.1} parent=35 // pred_check
          %p362 = pneg %p63
        $region38: #{tpu_custom_call.1} parent=35 // pred_check_branch
          %364 = sbr.rel (%p362) target = $region40
        $region39: #{tpu_custom_call.1} parent=35 // pred_region
          %s365 = sand.u32 %s53, 1
          %s366 = scalar_lea.sflag [#allocation5], %s365
          %s367 = sand.u32 %s53, 1
          %s368 = smul.addr %s367, 8
          %s369 = scalar_lea.vmem [#allocation4], %s368
          %s371 = ssub.s32 128, 128
          %372 = vsyncadd %s366, %s371
          %s373 = sadd.s32 %s37, %s36
          %s374 = smul.addr %s373, 128
          %s375 = scalar_lea.hbm %s0, %s374
          %s377 = sshll.u32 %s369, 4
          %s378 = int_to_ptr.vmem [resolvable:$true] %s377
          %380 = dma.hbm_to_vmem [thread:$0]  %s375, 128, %s378, %s366
        $region40: #{tpu_custom_call.1} parent=35 // pred_fallthru
          _
        // Predicated region
        $region41: #{tpu_custom_call.1} parent=35 // pred_check
          %p381 = pneg %p89
        $region42: #{tpu_custom_call.1} parent=35 // pred_check_branch
          %383 = sbr.rel (%p381) target = $region44
        $region43: #{tpu_custom_call.1} parent=35 // pred_region
          %s384 = sand.u32 %s29, 1
          %s385 = scalar_lea.sflag [#allocation8], %s384
          %s386 = sand.u32 %s79, 1
          %s387 = smul.addr %s386, 8
          %s388 = scalar_lea.vmem [#allocation7], %s387
          %s390 = ssub.s32 128, 128
          %391 = vsyncadd %s385, %s390
          %s392 = smul.addr %s36, 128
          %s393 = scalar_lea.hbm %s1, %s392
          %s395 = sshll.u32 %s388, 4
          %s396 = int_to_ptr.vmem [resolvable:$true] %s395
          %398 = dma.hbm_to_vmem [thread:$0]  %s393, 128, %s396, %s385
        $region44: #{tpu_custom_call.1} parent=35 // pred_fallthru
          _
        // Predicated region
        $region45: #{tpu_custom_call.1} parent=35 // pred_check
          %p399 = pneg %p115
        $region46: #{tpu_custom_call.1} parent=35 // pred_check_branch
          %401 = sbr.rel (%p399) target = $region48
        $region47: #{tpu_custom_call.1} parent=35 // pred_region
          %s402 = sand.u32 %s29, 1
          %s403 = scalar_lea.sflag [#allocation8], %s402
          %s404 = sand.u32 %s105, 1
          %s405 = smul.addr %s404, 8
          %s406 = scalar_lea.vmem [#allocation9], %s405
          %s408 = ssub.s32 128, 128
          %409 = vsyncadd %s403, %s408
          %s410 = smul.addr %s36, 128
          %s411 = scalar_lea.hbm %s2, %s410
          %s413 = sshll.u32 %s406, 4
          %s414 = int_to_ptr.vmem [resolvable:$true] %s413
          %416 = dma.hbm_to_vmem [thread:$0]  %s411, 128, %s414, %s403
        $region48: #{tpu_custom_call.1} parent=35 // pred_fallthru
          _
        // Predicated region
        $region49: #{tpu_custom_call.1} parent=35 // pred_check
          %p417 = pneg %p141
        $region50: #{tpu_custom_call.1} parent=35 // pred_check_branch
          %419 = sbr.rel (%p417) target = $region52
        $region51: #{tpu_custom_call.1} parent=35 // pred_region
          %s420 = sand.u32 %s29, 1
          %s421 = scalar_lea.sflag [#allocation11], %s420
          %s422 = sand.u32 %s131, 1
          %s423 = scalar_lea.vmem [#allocation10], %s422
          %s425 = ssub.s32 16, 16
          %426 = vsyncadd %s421, %s425
          %s427 = smul.addr %s36, 16
          %s428 = scalar_lea.hbm %s3, %s427
          %s430 = sshll.u32 %s423, 4
          %s431 = int_to_ptr.vmem [resolvable:$true] %s430
          %433 = dma.hbm_to_vmem [thread:$0]  %s428, 16, %s431, %s421
        $region52: #{tpu_custom_call.1} parent=35 // pred_fallthru
          _
      $region36: #{tpu_custom_call.1} parent=5 // pred_fallthru
        _
      %p434 = scmp.le.s32.totalorder 1, %s29
      %p435 = scmp.lt.s32.totalorder %s29, 3
      %p436 = pnand %p434, %p435
      %p437 = pneg %p436
      // Predicated region
      $region53: #{tpu_custom_call.1} parent=5 // pred_check
        _
      $region54: #{tpu_custom_call.1} parent=5 // pred_check_branch
        %439 = sbr.rel (%p436) target = $region56
      $region55: #{tpu_custom_call.1} parent=5 // pred_region
        %s440 = ssub.s32 %s29, 1
        %s441 = sand.u32 %s56, 1
        %s442 = scalar_lea.sflag [#allocation5], %s441
        %s443 = sand.u32 %s56, 1
        %s444 = smul.addr %s443, 8
        %s445 = scalar_lea.vmem [#allocation4], %s444
        // Predicated region
        $region57: #{tpu_custom_call.1} parent=55 // pred_check
          %p446 = pneg %p69
        $region58: #{tpu_custom_call.1} parent=55 // pred_check_branch
          %448 = sbr.rel (%p446) target = $region60
        $region59: #{tpu_custom_call.1} parent=55 // pred_region
          %449 = dma.done %s442, 128
        $region60: #{tpu_custom_call.1} parent=55 // pred_fallthru
          _
        %s450 = sand.u32 %s34, 1
        %s451 = scalar_lea.sflag [#allocation8], %s450
        %s452 = sand.u32 %s82, 1
        %s453 = smul.addr %s452, 8
        %s454 = scalar_lea.vmem [#allocation7], %s453
        // Predicated region
        $region61: #{tpu_custom_call.1} parent=55 // pred_check
          %p455 = pneg %p95
        $region62: #{tpu_custom_call.1} parent=55 // pred_check_branch
          %457 = sbr.rel (%p455) target = $region64
        $region63: #{tpu_custom_call.1} parent=55 // pred_region
          %458 = dma.done %s451, 128
        $region64: #{tpu_custom_call.1} parent=55 // pred_fallthru
          _
        %s459 = sand.u32 %s34, 1
        %s460 = scalar_lea.sflag [#allocation8], %s459
        %s461 = sand.u32 %s108, 1
        %s462 = smul.addr %s461, 8
        %s463 = scalar_lea.vmem [#allocation9], %s462
        // Predicated region
        $region65: #{tpu_custom_call.1} parent=55 // pred_check
          %p464 = pneg %p121
        $region66: #{tpu_custom_call.1} parent=55 // pred_check_branch
          %466 = sbr.rel (%p464) target = $region68
        $region67: #{tpu_custom_call.1} parent=55 // pred_region
          %467 = dma.done %s460, 128
        $region68: #{tpu_custom_call.1} parent=55 // pred_fallthru
          _
        %s468 = sand.u32 %s34, 1
        %s469 = scalar_lea.sflag [#allocation11], %s468
        %s470 = sand.u32 %s134, 1
        %s471 = scalar_lea.vmem [#allocation10], %s470
        // Predicated region
        $region69: #{tpu_custom_call.1} parent=55 // pred_check
          %p472 = pneg %p147
        $region70: #{tpu_custom_call.1} parent=55 // pred_check_branch
          %474 = sbr.rel (%p472) target = $region72
        $region71: #{tpu_custom_call.1} parent=55 // pred_region
          %475 = dma.done %s469, 16
        $region72: #{tpu_custom_call.1} parent=55 // pred_fallthru
          _
        // Predicated region
        $region73: #{tpu_custom_call.1} parent=55 // pred_check
          %p476 = pneg %p168
        $region74: #{tpu_custom_call.1} parent=55 // pred_check_branch
          %478 = sbr.rel (%p476) target = $region76
        $region75: #{tpu_custom_call.1} parent=55 // pred_region
          %479 = dma.done [#allocation11], 256
        $region76: #{tpu_custom_call.1} parent=55 // pred_fallthru
          _
        // Predicated region
        $region77: #{tpu_custom_call.1} parent=55 // pred_check
          %p480 = pneg %p189
        $region78: #{tpu_custom_call.1} parent=55 // pred_check_branch
          %482 = sbr.rel (%p480) target = $region80
        $region79: #{tpu_custom_call.1} parent=55 // pred_region
          %483 = dma.done [#allocation14], 256
        $region80: #{tpu_custom_call.1} parent=55 // pred_fallthru
          _
        // Predicated region
        $region81: #{tpu_custom_call.1} parent=55 // pred_check
          %p484 = pneg %p210
        $region82: #{tpu_custom_call.1} parent=55 // pred_check_branch
          %486 = sbr.rel (%p484) target = $region84
        $region83: #{tpu_custom_call.1} parent=55 // pred_region
          %487 = dma.done [#allocation14], 256
        $region84: #{tpu_custom_call.1} parent=55 // pred_fallthru
          _
        // Predicated region
        $region85: #{tpu_custom_call.1} parent=55 // pred_check
          %p488 = pneg %p231
        $region86: #{tpu_custom_call.1} parent=55 // pred_check_branch
          %490 = sbr.rel (%p488) target = $region88
        $region87: #{tpu_custom_call.1} parent=55 // pred_region
          %491 = dma.done [#allocation17], 256
        $region88: #{tpu_custom_call.1} parent=55 // pred_fallthru
          _
        // Predicated region
        $region89: #{tpu_custom_call.1} parent=55 // pred_check
          %p492 = pneg %p252
        $region90: #{tpu_custom_call.1} parent=55 // pred_check_branch
          %494 = sbr.rel (%p492) target = $region92
        $region91: #{tpu_custom_call.1} parent=55 // pred_region
          %495 = dma.done [#allocation17], 64
        $region92: #{tpu_custom_call.1} parent=55 // pred_fallthru
          _
        %s496 = sand.u32 %s56, 1
        %s497 = scalar_lea.sflag [#allocation5], %s496
        %s498 = sand.u32 %s56, 1
        %s499 = smul.addr %s498, 8
        %s500 = scalar_lea.vmem [#allocation4], %s499
        %p501 = pneg %p69
        %p502 = pneg %p66
        %s503 = sand.u32 %s34, 1
        %s504 = scalar_lea.sflag [#allocation8], %s503
        %s505 = sand.u32 %s82, 1
        %s506 = smul.addr %s505, 8
        %s507 = scalar_lea.vmem [#allocation7], %s506
        %p508 = pneg %p95
        %p509 = pneg %p92
        %s510 = sand.u32 %s34, 1
        %s511 = scalar_lea.sflag [#allocation8], %s510
        %s512 = sand.u32 %s108, 1
        %s513 = smul.addr %s512, 8
        %s514 = scalar_lea.vmem [#allocation9], %s513
        %p515 = pneg %p121
        %p516 = pneg %p118
        %s517 = sand.u32 %s34, 1
        %s518 = scalar_lea.sflag [#allocation11], %s517
        %s519 = sand.u32 %s134, 1
        %s520 = scalar_lea.vmem [#allocation10], %s519
        %p521 = pneg %p147
        %p522 = pneg %p144
        %p523 = pneg %p168
        %p524 = pneg %p165
        %p525 = pneg %p189
        %p526 = pneg %p186
        %p527 = pneg %p210
        %p528 = pneg %p207
        %p529 = pneg %p231
        %p530 = pneg %p228
        %p531 = pneg %p252
        %p532 = pneg %p249
        %p533 = pneg %p280
        %p534 = pneg %p277
        %s535 = sand.u32 %s267, 1
        %s536 = scalar_lea.sflag [#allocation6], %s535
        %s537 = sand.u32 %s267, 1
        %s538 = smul.addr %s537, 8
        %s539 = scalar_lea.vmem [#allocation19], %s538
        %p541 = scmp.eq.s32.totalorder %s39, 0
        // Predicated region
        $region93: #{tpu_custom_call.1} parent=55 // pred_check
          %p542 = pneg %p541
        $region94: #{tpu_custom_call.1} parent=55 // pred_check_branch
          %544 = sbr.rel (%p542) target = $region96
        $region95: #{tpu_custom_call.1} parent=55 // pred_region
          %v545 = vld [vmem:[%s454] sm:$0xff]
          %v546 = vpack.c.bf16 %v545, %v545
          %v547 = vld [vmem:[%s463] sm:$0xff]
          %v548 = vpack.c.bf16 %v547, %v547
          %v549 = vld [vmem:[#allocation13] sm:$0xf]
          %v550 = vld [vmem:[#allocation13 + $0x4] sm:$0xf]
          %v551 = vld [vmem:[#allocation13 + $0x8] sm:$0xf]
          %v552 = vld [vmem:[#allocation13 + $0xc] sm:$0xf]
          %v553 = vld [vmem:[#allocation18 + $0x1] sm:$0x1]
          %v554 = vlaneseq
          %v555 = vshrl.u32 %v554, 7
          %v556 = vsub.s32 0, %v555
          %v557 = vrot.slane %v553, %v556
          %v562 = vunpack.c.l.b16 %v549
          %v563 = vunpack.c.l.b16 %v550
          %v564 = vunpack.c.l.b16 %v551
          %v565 = vunpack.c.l.b16 %v552
          %v566 = vpack.c.b16 %v563, %v562
          %v567 = vpack.c.b16 %v565, %v564
          %vm570 = vcmask 261120
          %v572 = vsel %vm570, %v546, 0
          %574 = vmatprep.subr.bf16.mxu0 0
          %575 = vmatpush1.bf16.msra.mxu0 %v566
          %576 = vmatprep.subr.bf16.mxu0 0
          %577 = vmatpush1.bf16.msra.mxu0 %v567
          %578 = vmatprep.subr.bf16.mxu0 0
          %579 = vmatpush1.bf16.msra.mxu0 0
          %580 = vmatprep.subr.bf16.mxu0 0
          %581 = vmatpush1.bf16.msra.mxu0 0
          %582 = vmatprep.subr.bf16.mxu0 0
          %583 = vmatpush1.bf16.msra.mxu0 0
          %584 = vmatprep.subr.bf16.mxu0 0
          %585 = vmatpush1.bf16.msra.mxu0 0
          %586 = vmatprep.subr.bf16.mxu0 0
          %587 = vmatpush1.bf16.msra.mxu0 0
          %588 = vmatprep.subr.bf16.mxu0 0
          %589 = vmatpush1.bf16.msra.mxu0 0
          %590 = vmatprep.subr.bf16.mxu0 0
          %591 = vmatpush1.bf16.msra.mxu0 0
          %592 = vmatprep.subr.bf16.mxu0 0
          %593 = vmatpush1.bf16.msra.mxu0 0
          %594 = vmatprep.subr.bf16.mxu0 0
          %595 = vmatpush1.bf16.msra.mxu0 0
          %596 = vmatprep.subr.bf16.mxu0 0
          %597 = vmatpush1.bf16.msra.mxu0 0
          %598 = vmatprep.subr.bf16.mxu0 0
          %599 = vmatpush1.bf16.msra.mxu0 0
          %600 = vmatprep.subr.bf16.mxu0 0
          %601 = vmatpush1.bf16.msra.mxu0 0
          %602 = vmatprep.subr.bf16.mxu0 0
          %603 = vmatpush1.bf16.msra.mxu0 0
          %604 = vmatprep.subr.bf16.mxu0 0
          %605 = vmatpush1.bf16.msra.mxu0 0
          %606 = vmatprep.mubr.bf16.mxu0 0
          %607 = vmatmul.mubr.bf16.gmra.mrb[0].mxu0 %v572
          %v608 = vpop.f32.mrb[0].mxu0
          %v609 = vadd.f32 %v557, %v608
          %v610 = vpop.f32.mrb[0].mxu0
          %v611 = vpop.f32.mrb[0].mxu0
          %v612 = vpop.f32.mrb[0].mxu0
          %613 = vdwg.mxu0
          %v614 = vld [vmem:[#allocation15] sm:$0xf]
          %v615 = vld [vmem:[#allocation15 + $0x4] sm:$0xf]
          %v616 = vld [vmem:[#allocation15 + $0x8] sm:$0xf]
          %v617 = vld [vmem:[#allocation15 + $0xc] sm:$0xf]
          %v618 = vld [vmem:[#allocation18 + $0x2] sm:$0x1]
          %v619 = vlaneseq
          %v620 = vshrl.u32 %v619, 7
          %v621 = vsub.s32 0, %v620
          %v622 = vrot.slane %v618, %v621
          %v627 = vunpack.c.l.b16 %v614
          %v628 = vunpack.c.l.b16 %v615
          %v629 = vunpack.c.l.b16 %v616
          %v630 = vunpack.c.l.b16 %v617
          %v631 = vpack.c.b16 %v628, %v627
          %v632 = vpack.c.b16 %v630, %v629
          %v636 = vsel %vm570, %v548, 0
          %638 = vmatprep.subr.bf16.mxu0 0
          %639 = vmatpush1.bf16.msra.mxu0 %v631
          %640 = vmatprep.subr.bf16.mxu0 0
          %641 = vmatpush1.bf16.msra.mxu0 %v632
          %642 = vmatprep.subr.bf16.mxu0 0
          %643 = vmatpush1.bf16.msra.mxu0 0
          %644 = vmatprep.subr.bf16.mxu0 0
          %645 = vmatpush1.bf16.msra.mxu0 0
          %646 = vmatprep.subr.bf16.mxu0 0
          %647 = vmatpush1.bf16.msra.mxu0 0
          %648 = vmatprep.subr.bf16.mxu0 0
          %649 = vmatpush1.bf16.msra.mxu0 0
          %650 = vmatprep.subr.bf16.mxu0 0
          %651 = vmatpush1.bf16.msra.mxu0 0
          %652 = vmatprep.subr.bf16.mxu0 0
          %653 = vmatpush1.bf16.msra.mxu0 0
          %654 = vmatprep.subr.bf16.mxu0 0
          %655 = vmatpush1.bf16.msra.mxu0 0
          %656 = vmatprep.subr.bf16.mxu0 0
          %657 = vmatpush1.bf16.msra.mxu0 0
          %658 = vmatprep.subr.bf16.mxu0 0
          %659 = vmatpush1.bf16.msra.mxu0 0
          %660 = vmatprep.subr.bf16.mxu0 0
          %661 = vmatpush1.bf16.msra.mxu0 0
          %662 = vmatprep.subr.bf16.mxu0 0
          %663 = vmatpush1.bf16.msra.mxu0 0
          %664 = vmatprep.subr.bf16.mxu0 0
          %665 = vmatpush1.bf16.msra.mxu0 0
          %666 = vmatprep.subr.bf16.mxu0 0
          %667 = vmatpush1.bf16.msra.mxu0 0
          %668 = vmatprep.subr.bf16.mxu0 0
          %669 = vmatpush1.bf16.msra.mxu0 0
          %670 = vmatprep.mubr.bf16.mxu0 0
          %671 = vmatmul.mubr.bf16.gmra.mrb[0].mxu0 %v636
          %v672 = vpop.f32.mrb[0].mxu0
          %v673 = vadd.f32 %v622, %v672
          %v674 = vpop.f32.mrb[0].mxu0
          %v675 = vpop.f32.mrb[0].mxu0
          %v676 = vpop.f32.mrb[0].mxu0
          %677 = vdwg.mxu0
          %v678 = vpack.c.bf16 %v609, %v609
          %vm679 = vcmask 60416
          %680 = vst.msk [vmem:[#allocation2] sm:$0xf] %vm679, %v678
          %v681 = vpack.c.bf16 %v673, %v673
          %682 = vst.msk [vmem:[#allocation3] sm:$0xf] %vm679, %v681
          %v684 = vunpack.c.l.b16 %v678
          %v685 = vpack.c.b16 %v684, %v684
          %686 = vrot.lane.b32.xlu0 %v685, 120
          %v687 = vpop.permute.xlu0 %686
          %s689 = scalar_lea.vmem [#allocation2], 4
          %690 = vst.msk [vmem:[%s689] sm:$0xf] %vm679, %v687
          %v692 = vunpack.c.l.b16 %v681
          %v693 = vpack.c.b16 %v692, %v692
          %694 = vrot.lane.b32.xlu0 %v693, 120
          %v695 = vpop.permute.xlu0 %694
          %s697 = scalar_lea.vmem [#allocation3], 4
          %698 = vst.msk [vmem:[%s697] sm:$0xf] %vm679, %v695
          %699 = vrot.lane.b32.xlu0 %v685, 112
          %v700 = vpop.permute.xlu0 %699
          %s702 = scalar_lea.vmem [#allocation2], 8
          %703 = vst.msk [vmem:[%s702] sm:$0xf] %vm679, %v700
          %704 = vrot.lane.b32.xlu0 %v693, 112
          %v705 = vpop.permute.xlu0 %704
          %s707 = scalar_lea.vmem [#allocation3], 8
          %708 = vst.msk [vmem:[%s707] sm:$0xf] %vm679, %v705
          %709 = vrot.lane.b32.xlu0 %v685, 104
          %v710 = vpop.permute.xlu0 %709
          %s712 = scalar_lea.vmem [#allocation2], 12
          %713 = vst.msk [vmem:[%s712] sm:$0xf] %vm679, %v710
          %714 = vrot.lane.b32.xlu0 %v693, 104
          %v715 = vpop.permute.xlu0 %714
          %s717 = scalar_lea.vmem [#allocation3], 12
          %718 = vst.msk [vmem:[%s717] sm:$0xf] %vm679, %v715
        $region96: #{tpu_custom_call.1} parent=55 // pred_fallthru
          _
        %v719 = vld [vmem:[%s445] sm:$0xff]
        %v720 = vpack.c.bf16 %v719, %v719
        %v721 = vld [vmem:[#allocation12] sm:$0xf]
        %v722 = vld [vmem:[#allocation12 + $0x4] sm:$0xf]
        %v723 = vld [vmem:[#allocation12 + $0x8] sm:$0xf]
        %v724 = vld [vmem:[#allocation12 + $0xc] sm:$0xf]
        %v725 = vld [vmem:[#allocation18] sm:$0x1]
        %v726 = vlaneseq
        %v727 = vshrl.u32 %v726, 7
        %v728 = vsub.s32 0, %v727
        %v729 = vrot.slane %v725, %v728
        %v734 = vunpack.c.l.b16 %v721
        %v735 = vunpack.c.l.b16 %v722
        %v736 = vunpack.c.l.b16 %v723
        %v737 = vunpack.c.l.b16 %v724
        %v738 = vpack.c.b16 %v735, %v734
        %v739 = vpack.c.b16 %v737, %v736
        %vm742 = vcmask 261120
        %v744 = vsel %vm742, %v720, 0
        %746 = vmatprep.subr.bf16.mxu0 0
        %747 = vmatpush1.bf16.msra.mxu0 %v738
        %748 = vmatprep.subr.bf16.mxu0 0
        %749 = vmatpush1.bf16.msra.mxu0 %v739
        %750 = vmatprep.subr.bf16.mxu0 0
        %751 = vmatpush1.bf16.msra.mxu0 0
        %752 = vmatprep.subr.bf16.mxu0 0
        %753 = vmatpush1.bf16.msra.mxu0 0
        %754 = vmatprep.subr.bf16.mxu0 0
        %755 = vmatpush1.bf16.msra.mxu0 0
        %756 = vmatprep.subr.bf16.mxu0 0
        %757 = vmatpush1.bf16.msra.mxu0 0
        %758 = vmatprep.subr.bf16.mxu0 0
        %759 = vmatpush1.bf16.msra.mxu0 0
        %760 = vmatprep.subr.bf16.mxu0 0
        %761 = vmatpush1.bf16.msra.mxu0 0
        %762 = vmatprep.subr.bf16.mxu0 0
        %763 = vmatpush1.bf16.msra.mxu0 0
        %764 = vmatprep.subr.bf16.mxu0 0
        %765 = vmatpush1.bf16.msra.mxu0 0
        %766 = vmatprep.subr.bf16.mxu0 0
        %767 = vmatpush1.bf16.msra.mxu0 0
        %768 = vmatprep.subr.bf16.mxu0 0
        %769 = vmatpush1.bf16.msra.mxu0 0
        %770 = vmatprep.subr.bf16.mxu0 0
        %771 = vmatpush1.bf16.msra.mxu0 0
        %772 = vmatprep.subr.bf16.mxu0 0
        %773 = vmatpush1.bf16.msra.mxu0 0
        %774 = vmatprep.subr.bf16.mxu0 0
        %775 = vmatpush1.bf16.msra.mxu0 0
        %776 = vmatprep.subr.bf16.mxu0 0
        %777 = vmatpush1.bf16.msra.mxu0 0
        %778 = vmatprep.mubr.bf16.mxu0 0
        %779 = vmatmul.mubr.bf16.gmra.mrb[0].mxu0 %v744
        %v780 = vpop.f32.mrb[0].mxu0
        %v781 = vadd.f32 %v729, %v780
        %v782 = vpop.f32.mrb[0].mxu0
        %v783 = vpop.f32.mrb[0].mxu0
        %v784 = vpop.f32.mrb[0].mxu0
        %785 = vdwg.mxu0
        %v786 = vmul.f32 %v781, 0.35355338
        %788 = vrot.lane.b32.xlu0 %v786, 120
        %v789 = vpop.permute.xlu0 %788
        %791 = vrot.lane.b32.xlu0 %v786, 112
        %v792 = vpop.permute.xlu0 %791
        %794 = vrot.lane.b32.xlu0 %v786, 104
        %v795 = vpop.permute.xlu0 %794
        %v797 = vpack.c.bf16 %v786, %v786
        %v798 = vpack.c.bf16 %v789, %v789
        %v799 = vpack.c.bf16 %v792, %v792
        %v800 = vpack.c.bf16 %v795, %v795
        %v801 = vld [vmem:[#allocation2] sm:$0xf]
        %v802 = vld [vmem:[#allocation2 + $0x4] sm:$0xf]
        %v803 = vld [vmem:[#allocation2 + $0x8] sm:$0xf]
        %v804 = vld [vmem:[#allocation2 + $0xc] sm:$0xf]
        %vm805 = vcmask 64512
        %v807 = vsel %vm805, %v797, 0
        %v810 = vsel %vm805, %v801, 0
        %812 = vmatprep.subr.bf16.mxu0 0
        %813 = vmatpush1.bf16.xpose.msra.mxu0 %v810
        %814 = vmatprep.subr.bf16.mxu0 0
        %815 = vmatpush1.bf16.xpose.msra.mxu0 0
        %816 = vmatprep.subr.bf16.mxu0 0
        %817 = vmatpush1.bf16.xpose.msra.mxu0 0
        %818 = vmatprep.subr.bf16.mxu0 0
        %819 = vmatpush1.bf16.xpose.msra.mxu0 0
        %820 = vmatprep.subr.bf16.mxu0 0
        %821 = vmatpush1.bf16.xpose.msra.mxu0 0
        %822 = vmatprep.subr.bf16.mxu0 0
        %823 = vmatpush1.bf16.xpose.msra.mxu0 0
        %824 = vmatprep.subr.bf16.mxu0 0
        %825 = vmatpush1.bf16.xpose.msra.mxu0 0
        %826 = vmatprep.subr.bf16.mxu0 0
        %827 = vmatpush1.bf16.xpose.msra.mxu0 0
        %828 = vmatprep.subr.bf16.mxu0 0
        %829 = vmatpush1.bf16.xpose.msra.mxu0 0
        %830 = vmatprep.subr.bf16.mxu0 0
        %831 = vmatpush1.bf16.xpose.msra.mxu0 0
        %832 = vmatprep.subr.bf16.mxu0 0
        %833 = vmatpush1.bf16.xpose.msra.mxu0 0
        %834 = vmatprep.subr.bf16.mxu0 0
        %835 = vmatpush1.bf16.xpose.msra.mxu0 0
        %836 = vmatprep.subr.bf16.mxu0 0
        %837 = vmatpush1.bf16.xpose.msra.mxu0 0
        %838 = vmatprep.subr.bf16.mxu0 0
        %839 = vmatpush1.bf16.xpose.msra.mxu0 0
        %840 = vmatprep.subr.bf16.mxu0 0
        %841 = vmatpush1.bf16.xpose.msra.mxu0 0
        %842 = vmatprep.subr.bf16.mxu0 0
        %843 = vmatpush1.bf16.xpose.msra.mxu0 0
        %844 = vmatprep.mubr.bf16.mxu0 0
        %845 = vmatmul.mubr.bf16.gmra.mrb[0].mxu0 %v807
        %v846 = vpop.f32.mrb[0].mxu0
        %v847 = vadd.f32 0.0, %v846
        %v848 = vpop.f32.mrb[0].mxu0
        %v849 = vpop.f32.mrb[0].mxu0
        %v850 = vpop.f32.mrb[0].mxu0
        %851 = vdwg.mxu0
        %v853 = vsel %vm805, %v798, 0
        %v856 = vsel %vm805, %v802, 0
        %858 = vmatprep.subr.bf16.mxu0 0
        %859 = vmatpush1.bf16.xpose.msra.mxu0 %v856
        %860 = vmatprep.subr.bf16.mxu0 0
        %861 = vmatpush1.bf16.xpose.msra.mxu0 0
        %862 = vmatprep.subr.bf16.mxu0 0
        %863 = vmatpush1.bf16.xpose.msra.mxu0 0
        %864 = vmatprep.subr.bf16.mxu0 0
        %865 = vmatpush1.bf16.xpose.msra.mxu0 0
        %866 = vmatprep.subr.bf16.mxu0 0
        %867 = vmatpush1.bf16.xpose.msra.mxu0 0
        %868 = vmatprep.subr.bf16.mxu0 0
        %869 = vmatpush1.bf16.xpose.msra.mxu0 0
        %870 = vmatprep.subr.bf16.mxu0 0
        %871 = vmatpush1.bf16.xpose.msra.mxu0 0
        %872 = vmatprep.subr.bf16.mxu0 0
        %873 = vmatpush1.bf16.xpose.msra.mxu0 0
        %874 = vmatprep.subr.bf16.mxu0 0
        %875 = vmatpush1.bf16.xpose.msra.mxu0 0
        %876 = vmatprep.subr.bf16.mxu0 0
        %877 = vmatpush1.bf16.xpose.msra.mxu0 0
        %878 = vmatprep.subr.bf16.mxu0 0
        %879 = vmatpush1.bf16.xpose.msra.mxu0 0
        %880 = vmatprep.subr.bf16.mxu0 0
        %881 = vmatpush1.bf16.xpose.msra.mxu0 0
        %882 = vmatprep.subr.bf16.mxu0 0
        %883 = vmatpush1.bf16.xpose.msra.mxu0 0
        %884 = vmatprep.subr.bf16.mxu0 0
        %885 = vmatpush1.bf16.xpose.msra.mxu0 0
        %886 = vmatprep.subr.bf16.mxu0 0
        %887 = vmatpush1.bf16.xpose.msra.mxu0 0
        %888 = vmatprep.subr.bf16.mxu0 0
        %889 = vmatpush1.bf16.xpose.msra.mxu0 0
        %890 = vmatprep.mubr.bf16.mxu0 0
        %891 = vmatmul.mubr.bf16.gmra.mrb[0].mxu0 %v853
        %v892 = vpop.f32.mrb[0].mxu0
        %v893 = vadd.f32 0.0, %v892
        %v894 = vpop.f32.mrb[0].mxu0
        %v895 = vpop.f32.mrb[0].mxu0
        %v896 = vpop.f32.mrb[0].mxu0
        %897 = vdwg.mxu0
        %v899 = vsel %vm805, %v799, 0
        %v902 = vsel %vm805, %v803, 0
        %904 = vmatprep.subr.bf16.mxu0 0
        %905 = vmatpush1.bf16.xpose.msra.mxu0 %v902
        %906 = vmatprep.subr.bf16.mxu0 0
        %907 = vmatpush1.bf16.xpose.msra.mxu0 0
        %908 = vmatprep.subr.bf16.mxu0 0
        %909 = vmatpush1.bf16.xpose.msra.mxu0 0
        %910 = vmatprep.subr.bf16.mxu0 0
        %911 = vmatpush1.bf16.xpose.msra.mxu0 0
        %912 = vmatprep.subr.bf16.mxu0 0
        %913 = vmatpush1.bf16.xpose.msra.mxu0 0
        %914 = vmatprep.subr.bf16.mxu0 0
        %915 = vmatpush1.bf16.xpose.msra.mxu0 0
        %916 = vmatprep.subr.bf16.mxu0 0
        %917 = vmatpush1.bf16.xpose.msra.mxu0 0
        %918 = vmatprep.subr.bf16.mxu0 0
        %919 = vmatpush1.bf16.xpose.msra.mxu0 0
        %920 = vmatprep.subr.bf16.mxu0 0
        %921 = vmatpush1.bf16.xpose.msra.mxu0 0
        %922 = vmatprep.subr.bf16.mxu0 0
        %923 = vmatpush1.bf16.xpose.msra.mxu0 0
        %924 = vmatprep.subr.bf16.mxu0 0
        %925 = vmatpush1.bf16.xpose.msra.mxu0 0
        %926 = vmatprep.subr.bf16.mxu0 0
        %927 = vmatpush1.bf16.xpose.msra.mxu0 0
        %928 = vmatprep.subr.bf16.mxu0 0
        %929 = vmatpush1.bf16.xpose.msra.mxu0 0
        %930 = vmatprep.subr.bf16.mxu0 0
        %931 = vmatpush1.bf16.xpose.msra.mxu0 0
        %932 = vmatprep.subr.bf16.mxu0 0
        %933 = vmatpush1.bf16.xpose.msra.mxu0 0
        %934 = vmatprep.subr.bf16.mxu0 0
        %935 = vmatpush1.bf16.xpose.msra.mxu0 0
        %936 = vmatprep.mubr.bf16.mxu0 0
        %937 = vmatmul.mubr.bf16.gmra.mrb[0].mxu0 %v899
        %v938 = vpop.f32.mrb[0].mxu0
        %v939 = vadd.f32 0.0, %v938
        %v940 = vpop.f32.mrb[0].mxu0
        %v941 = vpop.f32.mrb[0].mxu0
        %v942 = vpop.f32.mrb[0].mxu0
        %943 = vdwg.mxu0
        %v945 = vsel %vm805, %v800, 0
        %v948 = vsel %vm805, %v804, 0
        %950 = vmatprep.subr.bf16.mxu0 0
        %951 = vmatpush1.bf16.xpose.msra.mxu0 %v948
        %952 = vmatprep.subr.bf16.mxu0 0
        %953 = vmatpush1.bf16.xpose.msra.mxu0 0
        %954 = vmatprep.subr.bf16.mxu0 0
        %955 = vmatpush1.bf16.xpose.msra.mxu0 0
        %956 = vmatprep.subr.bf16.mxu0 0
        %957 = vmatpush1.bf16.xpose.msra.mxu0 0
        %958 = vmatprep.subr.bf16.mxu0 0
        %959 = vmatpush1.bf16.xpose.msra.mxu0 0
        %960 = vmatprep.subr.bf16.mxu0 0
        %961 = vmatpush1.bf16.xpose.msra.mxu0 0
        %962 = vmatprep.subr.bf16.mxu0 0
        %963 = vmatpush1.bf16.xpose.msra.mxu0 0
        %964 = vmatprep.subr.bf16.mxu0 0
        %965 = vmatpush1.bf16.xpose.msra.mxu0 0
        %966 = vmatprep.subr.bf16.mxu0 0
        %967 = vmatpush1.bf16.xpose.msra.mxu0 0
        %968 = vmatprep.subr.bf16.mxu0 0
        %969 = vmatpush1.bf16.xpose.msra.mxu0 0
        %970 = vmatprep.subr.bf16.mxu0 0
        %971 = vmatpush1.bf16.xpose.msra.mxu0 0
        %972 = vmatprep.subr.bf16.mxu0 0
        %973 = vmatpush1.bf16.xpose.msra.mxu0 0
        %974 = vmatprep.subr.bf16.mxu0 0
        %975 = vmatpush1.bf16.xpose.msra.mxu0 0
        %976 = vmatprep.subr.bf16.mxu0 0
        %977 = vmatpush1.bf16.xpose.msra.mxu0 0
        %978 = vmatprep.subr.bf16.mxu0 0
        %979 = vmatpush1.bf16.xpose.msra.mxu0 0
        %980 = vmatprep.subr.bf16.mxu0 0
        %981 = vmatpush1.bf16.xpose.msra.mxu0 0
        %982 = vmatprep.mubr.bf16.mxu0 0
        %983 = vmatmul.mubr.bf16.gmra.mrb[0].mxu0 %v945
        %v984 = vpop.f32.mrb[0].mxu0
        %v985 = vadd.f32 0.0, %v984
        %v986 = vpop.f32.mrb[0].mxu0
        %v987 = vpop.f32.mrb[0].mxu0
        %v988 = vpop.f32.mrb[0].mxu0
        %989 = vdwg.mxu0
        %v990 = vld [vmem:[%s471] sm:$0x1]
        %vm991 = vcmp.eq.s32.totalorder %v990, 0
        %v992 = vsel %vm991, 1, 0
        %v993 = vlaneseq
        %v994 = vshrl.u32 %v993, 7
        %v995 = vsub.s32 0, %v994
        %v996 = vrot.slane %v992, %v995
        %vm997 = vcmp.eq.s32.totalorder %v996, 1
        %v998 = vsel %vm997, -1e+09, %v847
        %v999 = vsel %vm997, -1e+09, %v893
        %v1000 = vsel %vm997, -1e+09, %v939
        %v1001 = vsel %vm997, -1e+09, %v985
        %v1002 = vsel %vm805, %v998, -inf
        %1003 = vmax.xlane.f32.xlu0 %v1002
        %v1004 = vpop.xlane.xlu0 %1003
        %v1005 = vsel %vm805, %v999, -inf
        %1006 = vmax.xlane.f32.xlu0 %v1005
        %v1007 = vpop.xlane.xlu0 %1006
        %v1008 = vsel %vm805, %v1000, -inf
        %1009 = vmax.xlane.f32.xlu0 %v1008
        %v1010 = vpop.xlane.xlu0 %1009
        %v1011 = vsel %vm805, %v1001, -inf
        %1012 = vmax.xlane.f32.xlu0 %v1011
        %v1013 = vpop.xlane.xlu0 %1012
        %v1014 = vsub.f32 %v998, %v1004
        %v1015 = vsub.f32 %v999, %v1007
        %v1016 = vsub.f32 %v1000, %v1010
        %v1017 = vsub.f32 %v1001, %v1013
        %v1018 = vmul.f32 %v1014, 1.442695
        %v1019 = vpow.pop %v1018
        %v1020 = vmul.f32 %v1015, 1.442695
        %v1021 = vpow.pop %v1020
        %v1022 = vmul.f32 %v1016, 1.442695
        %v1023 = vpow.pop %v1022
        %v1024 = vmul.f32 %v1017, 1.442695
        %v1025 = vpow.pop %v1024
        %v1026 = vsel %vm805, %v1019, 0.0
        %1027 = vadd.xlane.f32.xlu0 %v1026
        %v1028 = vpop.xlane.xlu0 %1027
        %v1029 = vsel %vm805, %v1021, 0.0
        %1030 = vadd.xlane.f32.xlu0 %v1029
        %v1031 = vpop.xlane.xlu0 %1030
        %v1032 = vsel %vm805, %v1023, 0.0
        %1033 = vadd.xlane.f32.xlu0 %v1032
        %v1034 = vpop.xlane.xlu0 %1033
        %v1035 = vsel %vm805, %v1025, 0.0
        %1036 = vadd.xlane.f32.xlu0 %v1035
        %v1037 = vpop.xlane.xlu0 %1036
        %v1038 = vrcp.pop %v1028
        %v1039 = vrcp.pop %v1031
        %v1040 = vrcp.pop %v1034
        %v1041 = vrcp.pop %v1037
        %v1042 = vmul.f32 %v1019, %v1038
        %v1043 = vmul.f32 %v1021, %v1039
        %v1044 = vmul.f32 %v1023, %v1040
        %v1045 = vmul.f32 %v1025, %v1041
        %v1046 = vpack.c.bf16 %v1042, %v1042
        %v1047 = vpack.c.bf16 %v1043, %v1043
        %v1048 = vpack.c.bf16 %v1044, %v1044
        %v1049 = vpack.c.bf16 %v1045, %v1045
        %v1050 = vld [vmem:[#allocation3] sm:$0xf]
        %v1051 = vld [vmem:[#allocation3 + $0x4] sm:$0xf]
        %v1052 = vld [vmem:[#allocation3 + $0x8] sm:$0xf]
        %v1053 = vld [vmem:[#allocation3 + $0xc] sm:$0xf]
        %v1055 = vsel %vm805, %v1046, 0
        %vm1057 = vcmask 1043456
        %v1059 = vsel %vm1057, %v1050, 0
        %1061 = vmatprep.subr.bf16.mxu0 0
        %1062 = vmatpush1.bf16.msra.mxu0 %v1059
        %1063 = vmatprep.subr.bf16.mxu0 0
        %1064 = vmatpush1.bf16.msra.mxu0 0
        %1065 = vmatprep.subr.bf16.mxu0 0
        %1066 = vmatpush1.bf16.msra.mxu0 0
        %1067 = vmatprep.subr.bf16.mxu0 0
        %1068 = vmatpush1.bf16.msra.mxu0 0
        %1069 = vmatprep.subr.bf16.mxu0 0
        %1070 = vmatpush1.bf16.msra.mxu0 0
        %1071 = vmatprep.subr.bf16.mxu0 0
        %1072 = vmatpush1.bf16.msra.mxu0 0
        %1073 = vmatprep.subr.bf16.mxu0 0
        %1074 = vmatpush1.bf16.msra.mxu0 0
        %1075 = vmatprep.subr.bf16.mxu0 0
        %1076 = vmatpush1.bf16.msra.mxu0 0
        %1077 = vmatprep.subr.bf16.mxu0 0
        %1078 = vmatpush1.bf16.msra.mxu0 0
        %1079 = vmatprep.subr.bf16.mxu0 0
        %1080 = vmatpush1.bf16.msra.mxu0 0
        %1081 = vmatprep.subr.bf16.mxu0 0
        %1082 = vmatpush1.bf16.msra.mxu0 0
        %1083 = vmatprep.subr.bf16.mxu0 0
        %1084 = vmatpush1.bf16.msra.mxu0 0
        %1085 = vmatprep.subr.bf16.mxu0 0
        %1086 = vmatpush1.bf16.msra.mxu0 0
        %1087 = vmatprep.subr.bf16.mxu0 0
        %1088 = vmatpush1.bf16.msra.mxu0 0
        %1089 = vmatprep.subr.bf16.mxu0 0
        %1090 = vmatpush1.bf16.msra.mxu0 0
        %1091 = vmatprep.subr.bf16.mxu0 0
        %1092 = vmatpush1.bf16.msra.mxu0 0
        %1093 = vmatprep.mubr.bf16.mxu0 0
        %1094 = vmatmul.mubr.bf16.gmra.mrb[0].mxu0 %v1055
        %v1095 = vpop.f32.mrb[0].mxu0
        %v1096 = vadd.f32 0.0, %v1095
        %v1097 = vpop.f32.mrb[0].mxu0
        %v1098 = vpop.f32.mrb[0].mxu0
        %v1099 = vpop.f32.mrb[0].mxu0
        %1100 = vdwg.mxu0
        %v1102 = vsel %vm805, %v1047, 0
        %v1105 = vsel %vm1057, %v1051, 0
        %1107 = vmatprep.subr.bf16.mxu0 0
        %1108 = vmatpush1.bf16.msra.mxu0 %v1105
        %1109 = vmatprep.subr.bf16.mxu0 0
        %1110 = vmatpush1.bf16.msra.mxu0 0
        %1111 = vmatprep.subr.bf16.mxu0 0
        %1112 = vmatpush1.bf16.msra.mxu0 0
        %1113 = vmatprep.subr.bf16.mxu0 0
        %1114 = vmatpush1.bf16.msra.mxu0 0
        %1115 = vmatprep.subr.bf16.mxu0 0
        %1116 = vmatpush1.bf16.msra.mxu0 0
        %1117 = vmatprep.subr.bf16.mxu0 0
        %1118 = vmatpush1.bf16.msra.mxu0 0
        %1119 = vmatprep.subr.bf16.mxu0 0
        %1120 = vmatpush1.bf16.msra.mxu0 0
        %1121 = vmatprep.subr.bf16.mxu0 0
        %1122 = vmatpush1.bf16.msra.mxu0 0
        %1123 = vmatprep.subr.bf16.mxu0 0
        %1124 = vmatpush1.bf16.msra.mxu0 0
        %1125 = vmatprep.subr.bf16.mxu0 0
        %1126 = vmatpush1.bf16.msra.mxu0 0
        %1127 = vmatprep.subr.bf16.mxu0 0
        %1128 = vmatpush1.bf16.msra.mxu0 0
        %1129 = vmatprep.subr.bf16.mxu0 0
        %1130 = vmatpush1.bf16.msra.mxu0 0
        %1131 = vmatprep.subr.bf16.mxu0 0
        %1132 = vmatpush1.bf16.msra.mxu0 0
        %1133 = vmatprep.subr.bf16.mxu0 0
        %1134 = vmatpush1.bf16.msra.mxu0 0
        %1135 = vmatprep.subr.bf16.mxu0 0
        %1136 = vmatpush1.bf16.msra.mxu0 0
        %1137 = vmatprep.subr.bf16.mxu0 0
        %1138 = vmatpush1.bf16.msra.mxu0 0
        %1139 = vmatprep.mubr.bf16.mxu0 0
        %1140 = vmatmul.mubr.bf16.gmra.mrb[0].mxu0 %v1102
        %v1141 = vpop.f32.mrb[0].mxu0
        %v1142 = vadd.f32 0.0, %v1141
        %v1143 = vpop.f32.mrb[0].mxu0
        %v1144 = vpop.f32.mrb[0].mxu0
        %v1145 = vpop.f32.mrb[0].mxu0
        %1146 = vdwg.mxu0
        %v1148 = vsel %vm805, %v1048, 0
        %v1151 = vsel %vm1057, %v1052, 0
        %1153 = vmatprep.subr.bf16.mxu0 0
        %1154 = vmatpush1.bf16.msra.mxu0 %v1151
        %1155 = vmatprep.subr.bf16.mxu0 0
        %1156 = vmatpush1.bf16.msra.mxu0 0
        %1157 = vmatprep.subr.bf16.mxu0 0
        %1158 = vmatpush1.bf16.msra.mxu0 0
        %1159 = vmatprep.subr.bf16.mxu0 0
        %1160 = vmatpush1.bf16.msra.mxu0 0
        %1161 = vmatprep.subr.bf16.mxu0 0
        %1162 = vmatpush1.bf16.msra.mxu0 0
        %1163 = vmatprep.subr.bf16.mxu0 0
        %1164 = vmatpush1.bf16.msra.mxu0 0
        %1165 = vmatprep.subr.bf16.mxu0 0
        %1166 = vmatpush1.bf16.msra.mxu0 0
        %1167 = vmatprep.subr.bf16.mxu0 0
        %1168 = vmatpush1.bf16.msra.mxu0 0
        %1169 = vmatprep.subr.bf16.mxu0 0
        %1170 = vmatpush1.bf16.msra.mxu0 0
        %1171 = vmatprep.subr.bf16.mxu0 0
        %1172 = vmatpush1.bf16.msra.mxu0 0
        %1173 = vmatprep.subr.bf16.mxu0 0
        %1174 = vmatpush1.bf16.msra.mxu0 0
        %1175 = vmatprep.subr.bf16.mxu0 0
        %1176 = vmatpush1.bf16.msra.mxu0 0
        %1177 = vmatprep.subr.bf16.mxu0 0
        %1178 = vmatpush1.bf16.msra.mxu0 0
        %1179 = vmatprep.subr.bf16.mxu0 0
        %1180 = vmatpush1.bf16.msra.mxu0 0
        %1181 = vmatprep.subr.bf16.mxu0 0
        %1182 = vmatpush1.bf16.msra.mxu0 0
        %1183 = vmatprep.subr.bf16.mxu0 0
        %1184 = vmatpush1.bf16.msra.mxu0 0
        %1185 = vmatprep.mubr.bf16.mxu0 0
        %1186 = vmatmul.mubr.bf16.gmra.mrb[0].mxu0 %v1148
        %v1187 = vpop.f32.mrb[0].mxu0
        %v1188 = vadd.f32 0.0, %v1187
        %v1189 = vpop.f32.mrb[0].mxu0
        %v1190 = vpop.f32.mrb[0].mxu0
        %v1191 = vpop.f32.mrb[0].mxu0
        %1192 = vdwg.mxu0
        %v1194 = vsel %vm805, %v1049, 0
        %v1197 = vsel %vm1057, %v1053, 0
        %1199 = vmatprep.subr.bf16.mxu0 0
        %1200 = vmatpush1.bf16.msra.mxu0 %v1197
        %1201 = vmatprep.subr.bf16.mxu0 0
        %1202 = vmatpush1.bf16.msra.mxu0 0
        %1203 = vmatprep.subr.bf16.mxu0 0
        %1204 = vmatpush1.bf16.msra.mxu0 0
        %1205 = vmatprep.subr.bf16.mxu0 0
        %1206 = vmatpush1.bf16.msra.mxu0 0
        %1207 = vmatprep.subr.bf16.mxu0 0
        %1208 = vmatpush1.bf16.msra.mxu0 0
        %1209 = vmatprep.subr.bf16.mxu0 0
        %1210 = vmatpush1.bf16.msra.mxu0 0
        %1211 = vmatprep.subr.bf16.mxu0 0
        %1212 = vmatpush1.bf16.msra.mxu0 0
        %1213 = vmatprep.subr.bf16.mxu0 0
        %1214 = vmatpush1.bf16.msra.mxu0 0
        %1215 = vmatprep.subr.bf16.mxu0 0
        %1216 = vmatpush1.bf16.msra.mxu0 0
        %1217 = vmatprep.subr.bf16.mxu0 0
        %1218 = vmatpush1.bf16.msra.mxu0 0
        %1219 = vmatprep.subr.bf16.mxu0 0
        %1220 = vmatpush1.bf16.msra.mxu0 0
        %1221 = vmatprep.subr.bf16.mxu0 0
        %1222 = vmatpush1.bf16.msra.mxu0 0
        %1223 = vmatprep.subr.bf16.mxu0 0
        %1224 = vmatpush1.bf16.msra.mxu0 0
        %1225 = vmatprep.subr.bf16.mxu0 0
        %1226 = vmatpush1.bf16.msra.mxu0 0
        %1227 = vmatprep.subr.bf16.mxu0 0
        %1228 = vmatpush1.bf16.msra.mxu0 0
        %1229 = vmatprep.subr.bf16.mxu0 0
        %1230 = vmatpush1.bf16.msra.mxu0 0
        %1231 = vmatprep.mubr.bf16.mxu0 0
        %1232 = vmatmul.mubr.bf16.gmra.mrb[0].mxu0 %v1194
        %v1233 = vpop.f32.mrb[0].mxu0
        %v1234 = vadd.f32 0.0, %v1233
        %v1235 = vpop.f32.mrb[0].mxu0
        %v1236 = vpop.f32.mrb[0].mxu0
        %v1237 = vpop.f32.mrb[0].mxu0
        %1238 = vdwg.mxu0
        %1240 = vrot.lane.b32.xlu0 %v1142, 8
        %v1241 = vpop.permute.xlu0 %1240
        %1244 = vrot.lane.b32.xlu0 %v1188, 16
        %v1245 = vpop.permute.xlu0 %1244
        %1248 = vrot.lane.b32.xlu0 %v1234, 24
        %v1249 = vpop.permute.xlu0 %1248
        %v1251 = vsel %vm805, %v1096, %v1241
        %vm1252 = vcmask 130048
        %v1253 = vsel %vm1252, %v1251, %v1245
        %vm1254 = vcmask 195584
        %v1255 = vsel %vm1254, %v1253, %v1249
        %v1256 = vpack.c.bf16 %v1255, %v1255
        %v1257 = vld [vmem:[#allocation16] sm:$0xf]
        %v1258 = vld [vmem:[#allocation16 + $0x4] sm:$0xf]
        %v1259 = vld [vmem:[#allocation16 + $0x8] sm:$0xf]
        %v1260 = vld [vmem:[#allocation16 + $0xc] sm:$0xf]
        %v1261 = vld [vmem:[#allocation18 + $0x3] sm:$0x1]
        %v1262 = vlaneseq
        %v1263 = vshrl.u32 %v1262, 7
        %v1264 = vsub.s32 0, %v1263
        %v1265 = vrot.slane %v1261, %v1264
        %v1270 = vunpack.c.l.b16 %v1257
        %v1271 = vunpack.c.l.b16 %v1258
        %v1272 = vunpack.c.l.b16 %v1259
        %v1273 = vunpack.c.l.b16 %v1260
        %v1274 = vpack.c.b16 %v1271, %v1270
        %v1275 = vpack.c.b16 %v1273, %v1272
        %v1279 = vsel %vm742, %v1256, 0
        %1281 = vmatprep.subr.bf16.mxu0 0
        %1282 = vmatpush1.bf16.msra.mxu0 %v1274
        %1283 = vmatprep.subr.bf16.mxu0 0
        %1284 = vmatpush1.bf16.msra.mxu0 %v1275
        %1285 = vmatprep.subr.bf16.mxu0 0
        %1286 = vmatpush1.bf16.msra.mxu0 0
        %1287 = vmatprep.subr.bf16.mxu0 0
        %1288 = vmatpush1.bf16.msra.mxu0 0
        %1289 = vmatprep.subr.bf16.mxu0 0
        %1290 = vmatpush1.bf16.msra.mxu0 0
        %1291 = vmatprep.subr.bf16.mxu0 0
        %1292 = vmatpush1.bf16.msra.mxu0 0
        %1293 = vmatprep.subr.bf16.mxu0 0
        %1294 = vmatpush1.bf16.msra.mxu0 0
        %1295 = vmatprep.subr.bf16.mxu0 0
        %1296 = vmatpush1.bf16.msra.mxu0 0
        %1297 = vmatprep.subr.bf16.mxu0 0
        %1298 = vmatpush1.bf16.msra.mxu0 0
        %1299 = vmatprep.subr.bf16.mxu0 0
        %1300 = vmatpush1.bf16.msra.mxu0 0
        %1301 = vmatprep.subr.bf16.mxu0 0
        %1302 = vmatpush1.bf16.msra.mxu0 0
        %1303 = vmatprep.subr.bf16.mxu0 0
        %1304 = vmatpush1.bf16.msra.mxu0 0
        %1305 = vmatprep.subr.bf16.mxu0 0
        %1306 = vmatpush1.bf16.msra.mxu0 0
        %1307 = vmatprep.subr.bf16.mxu0 0
        %1308 = vmatpush1.bf16.msra.mxu0 0
        %1309 = vmatprep.subr.bf16.mxu0 0
        %1310 = vmatpush1.bf16.msra.mxu0 0
        %1311 = vmatprep.subr.bf16.mxu0 0
        %1312 = vmatpush1.bf16.msra.mxu0 0
        %1313 = vmatprep.mubr.bf16.mxu0 0
        %1314 = vmatmul.mubr.bf16.gmra.mrb[0].mxu0 %v1279
        %v1315 = vpop.f32.mrb[0].mxu0
        %v1316 = vadd.f32 %v1265, %v1315
        %v1317 = vpop.f32.mrb[0].mxu0
        %v1318 = vpop.f32.mrb[0].mxu0
        %v1319 = vpop.f32.mrb[0].mxu0
        %1320 = vdwg.mxu0
        %1321 = vst.msk [vmem:[%s539] sm:$0xff] %vm742, %v1316
        %s1322 = sand.u32 %s267, 1
        %s1323 = scalar_lea.sflag [#allocation6], %s1322
        %s1324 = sand.u32 %s267, 1
        %s1325 = smul.addr %s1324, 8
        %s1326 = scalar_lea.vmem [#allocation19], %s1325
        // Predicated region
        $region97: #{tpu_custom_call.1} parent=55 // pred_check
          %p1327 = pneg %p277
        $region98: #{tpu_custom_call.1} parent=55 // pred_check_branch
          %1329 = sbr.rel (%p1327) target = $region100
        $region99: #{tpu_custom_call.1} parent=55 // pred_region
          %s1331 = ssub.s32 128, 128
          %1332 = vsyncadd %s1323, %s1331
          %s1333 = sadd.s32 %s39, %s38
          %s1334 = smul.addr %s1333, 128
          %s1335 = scalar_lea.hbm %s9, %s1334
          %s1337 = sshll.u32 %s1326, 4
          %s1338 = int_to_ptr.vmem [resolvable:$true] %s1337
          %1340 = dma.vmem_to_hbm [thread:$0]  %s1338, 128, %s1335, %s1323
        $region100: #{tpu_custom_call.1} parent=55 // pred_fallthru
          _
      $region56: #{tpu_custom_call.1} parent=5 // pred_fallthru
        _
      %p1341 = scmp.le.s32.totalorder 2, %s29
      // Predicated region
      $region101: #{tpu_custom_call.1} parent=5 // pred_check
        %p1342 = pneg %p1341
      $region102: #{tpu_custom_call.1} parent=5 // pred_check_branch
        %1344 = sbr.rel (%p1342) target = $region104
      $region103: #{tpu_custom_call.1} parent=5 // pred_region
        %s1345 = ssub.s32 %s29, 2
        // Predicated region
        $region105: #{tpu_custom_call.1} parent=103 // pred_check
          %p1346 = pneg %p283
        $region106: #{tpu_custom_call.1} parent=103 // pred_check_branch
          %1348 = sbr.rel (%p1346) target = $region108
        $region107: #{tpu_custom_call.1} parent=103 // pred_region
          %s1349 = sand.u32 %s268, 1
          %s1350 = scalar_lea.sflag [#allocation6], %s1349
          %s1351 = sand.u32 %s268, 1
          %s1352 = smul.addr %s1351, 8
          %s1353 = scalar_lea.vmem [#allocation19], %s1352
          %1354 = dma.done %s1350, 128
        $region108: #{tpu_custom_call.1} parent=103 // pred_fallthru
          _
      $region104: #{tpu_custom_call.1} parent=5 // pred_fallthru
        _
    $region6: #{tpu_custom_call.1} parent=1 // loop_footer
      %s33 = sadd.s32 1, %s29
    $region7: #{tpu_custom_call.1} parent=1 // loop_footer_branch
      %28 = sbr.rel target = $region3
    $region8: #{tpu_custom_call.1} parent=1 // loop_exit
      _
    %1355 = vsyncpa [#allocation5], 1
    %s1356 = scalar_lea.sflag [#allocation5], 1
    %1357 = vsyncpa %s1356, 1
    %1358 = vsyncpa [#allocation8], 1
    %s1359 = scalar_lea.sflag [#allocation8], 1
    %1360 = vsyncpa %s1359, 1
    %1361 = vsyncpa [#allocation11], 1
    %s1362 = scalar_lea.sflag [#allocation11], 1
    %1363 = vsyncpa %s1362, 1
    %1364 = vsyncpa [#allocation14], 1
    %1365 = vsyncpa [#allocation17], 1
    %1366 = vsyncpa [#allocation6], 1
    %s1367 = scalar_lea.sflag [#allocation6], 1
    %1368 = vsyncpa %s1367, 1

</llo_original>
